<compile_context>
chip_gen: v7x
topology: tpu7x:2x2x1
jax: 0.10.0
libtpu: 0.0.40
codegen_flags: <defaults>
</compile_context>

<pallas_src>
import functools

import jax
import jax.numpy as jnp
from jax.experimental import pallas as pl
from jax.experimental.pallas import tpu as pltpu

LANE = 128


def _round_up(x, m):
    return pl.cdiv(x, m) * m


def _sublane(dtype):
    # Minimum sublane tile: 8 for 4-byte dtypes, 16 for 2-byte, 32 for 1-byte.
    return max(8, 32 // jnp.dtype(dtype).itemsize)


def _mlp_kernel(x_ref, w1_ref, b1_ref, w2_ref, b2_ref, w3_ref, b3_ref, o_ref,
                *, precision):
    """Linear -> Tanh -> Linear -> Tanh -> Linear on one batch tile."""
    x = x_ref[...]
    h = jnp.tanh(
        jnp.dot(x, w1_ref[...], preferred_element_type=jnp.float32,
                precision=precision) + b1_ref[...]
    )
    h = jnp.tanh(
        jnp.dot(h, w2_ref[...], preferred_element_type=jnp.float32,
                precision=precision) + b2_ref[...]
    )
    o = jnp.dot(h, w3_ref[...], preferred_element_type=jnp.float32,
                precision=precision) + b3_ref[...]
    o_ref[...] = o.astype(o_ref.dtype)


def prepare_params(params, dtype=jnp.float32):
    """One-time parameter prep (hoisted out of the per-call wrapper).

    Only the hidden dim is padded to a multiple of 128; the actuator (A) and
    output (O) dims are left at their logical sizes.
    params = (w1, b1, w2, b2, w3, b3) with w_i stored as (in, out).
    """
    w1, b1, w2, b2, w3, b3 = params
    A, H = w1.shape
    O = w3.shape[1]
    Hp = _round_up(H, LANE)
    pad_h = Hp - H
    w1p = jnp.pad(w1.astype(dtype), ((0, 0), (0, pad_h)))            # (A,  Hp)
    b1p = jnp.pad(b1.astype(dtype).reshape(1, -1), ((0, 0), (0, pad_h)))
    w2p = jnp.pad(w2.astype(dtype), ((0, pad_h), (0, pad_h)))        # (Hp, Hp)
    b2p = jnp.pad(b2.astype(dtype).reshape(1, -1), ((0, 0), (0, pad_h)))
    w3p = jnp.pad(w3.astype(dtype), ((0, pad_h), (0, 0)))            # (Hp, O)
    b3p = b3.astype(dtype).reshape(1, -1)                            # (1,  O)
    return (w1p, b1p, w2p, b2p, w3p, b3p)


def profiles_from_actuators(profiles_tensor, actuators_tensor, prepared_params,
                            *, max_tile_b=1024,
                            precision=jax.lax.Precision.HIGHEST):
    """Pallas TPU implementation of ProfilesFromActuators.forward."""
    del profiles_tensor  # unused by the PyTorch forward as well

    w1p, b1p, w2p, b2p, w3p, b3p = prepared_params
    B, A = actuators_tensor.shape
    assert w1p.shape[0] == A, "prepared params do not match actuator width"
    Hp = w1p.shape[1]
    O = w3p.shape[1]
    dtype = actuators_tensor.dtype
    sub = _sublane(dtype)

    # Batch tiling: big tiles amortize the ~0.35us per-grid-step overhead.
    # Split the batch only when both tiles stay >= 256 rows (keeps v7x's two
    # TensorCores busy via the "parallel" axis without penalizing v5e/v6e).
    B8 = _round_up(B, sub)
    if B8 <= max_tile_b:
        tile_b = _round_up(pl.cdiv(B8, 2), sub) if B8 >= 512 else B8
    else:
        tile_b = max_tile_b
    B_pad = _round_up(B8, tile_b)
    grid = (B_pad // tile_b,)

    x_p = (actuators_tensor if B_pad == B
           else jnp.pad(actuators_tensor, ((0, B_pad - B), (0, 0))))

    itemsize = jnp.dtype(dtype).itemsize
    weight_elems = A * Hp + Hp * Hp + Hp * O + 2 * Hp + O
    flops = 2 * B_pad * (A * Hp + Hp * Hp + Hp * O)
    transcendentals = 2 * B_pad * Hp
    bytes_accessed = itemsize * (B_pad * A + weight_elems + B_pad * O)

    # VMEM budget: double-buffered x/out tiles + resident params + headroom.
    vmem_bytes = int(2 * itemsize * tile_b * (A + O)
                     + 2 * itemsize * weight_elems
                     + (8 << 20))
    vmem_limit = min(max(vmem_bytes, 16 << 20), 64 << 20)

    kernel = functools.partial(_mlp_kernel, precision=precision)

    out_p = pl.pallas_call(
        kernel,
        out_shape=jax.ShapeDtypeStruct((B_pad, O), dtype),
        grid_spec=pltpu.PrefetchScalarGridSpec(
            num_scalar_prefetch=0,
            grid=grid,
            in_specs=[
                pl.BlockSpec((tile_b, A), lambda i: (i, 0)),  # actuators tile (A unpadded)
                pl.BlockSpec((A, Hp), lambda i: (0, 0)),      # w1 (VMEM resident)
                pl.BlockSpec((1, Hp), lambda i: (0, 0)),      # b1
                pl.BlockSpec((Hp, Hp), lambda i: (0, 0)),     # w2
                pl.BlockSpec((1, Hp), lambda i: (0, 0)),      # b2
                pl.BlockSpec((Hp, O), lambda i: (0, 0)),      # w3 (O unpadded)
                pl.BlockSpec((1, O), lambda i: (0, 0)),       # b3
            ],
            out_specs=pl.BlockSpec((tile_b, O), lambda i: (i, 0)),
        ),
        compiler_params=pltpu.CompilerParams(
            dimension_semantics=("parallel",),
            vmem_limit_bytes=vmem_limit,
        ),
        cost_estimate=pl.CostEstimate(
            flops=flops,
            transcendentals=transcendentals,
            bytes_accessed=bytes_accessed,
        ),
    )(x_p, w1p, b1p, w2p, b2p, w3p, b3p)

    # Only the (rare) padded batch rows need slicing; lanes are already exact.
    return out_p if B_pad == B else out_p[:B]


if __name__ == "__main__":
    key = jax.random.PRNGKey(0)

    # Shapes implied by the module: small actuator vector -> hidden=30 MLP ->
    # len(profiles) * nProfilePoints outputs.
    n_actuators = 4
    n_profiles = 2
    n_profile_points = 16
    hidden = 30                       # PyTorch default hidden_size
    out_dim = n_profiles * n_profile_points
    batch = 16

    ks = jax.random.split(key, 8)
    scale = 0.3
    w1 = jax.random.normal(ks[0], (n_actuators, hidden), jnp.float32) * scale
    b1 = jax.random.normal(ks[1], (hidden,), jnp.float32) * scale
    w2 = jax.random.normal(ks[2], (hidden, hidden), jnp.float32) * scale
    b2 = jax.random.normal(ks[3], (hidden,), jnp.float32) * scale
    w3 = jax.random.normal(ks[4], (hidden, out_dim), jnp.float32) * scale
    b3 = jax.random.normal(ks[5], (out_dim,), jnp.float32) * scale

    actuators = jax.random.normal(ks[6], (batch, n_actuators), jnp.float32)
    profiles = jax.random.normal(ks[7], (batch, out_dim), jnp.float32)  # unused

    params = (w1, b1, w2, b2, w3, b3)
    prepared = prepare_params(params, dtype=actuators.dtype)  # one-time prep

    out = profiles_from_actuators(profiles, actuators, prepared)
    out = jax.block_until_ready(out)

    # Pure-JAX reference (same math as the PyTorch nn.Sequential).
    h_ref = jnp.tanh(actuators @ w1 + b1)
    h_ref = jnp.tanh(h_ref @ w2 + b2)
    ref = h_ref @ w3 + b3

    assert out.shape == (batch, out_dim) and out.dtype == actuators.dtype
    # HIGHEST-precision matmuls -> only tanh/accumulation-order level noise.
    assert jnp.allclose(out, ref, rtol=1e-3, atol=1e-3), float(
        jnp.max(jnp.abs(out - ref))
    )
    print("KERNEL_OK")
</pallas_src>

<mosaic_0001>
module attributes {stable_mosaic.version = 11 : i64} {
  func.func @_mlp_kernel(%arg0: i32, %arg1: memref<16x4xf32, #tpu.memory_space<vmem>>, %arg2: memref<4x128xf32, #tpu.memory_space<vmem>>, %arg3: memref<1x128xf32, #tpu.memory_space<vmem>>, %arg4: memref<128x128xf32, #tpu.memory_space<vmem>>, %arg5: memref<1x128xf32, #tpu.memory_space<vmem>>, %arg6: memref<128x32xf32, #tpu.memory_space<vmem>>, %arg7: memref<1x32xf32, #tpu.memory_space<vmem>>, %arg8: memref<16x32xf32, #tpu.memory_space<vmem>>) attributes {dimension_semantics = [#tpu.dimension_semantics<parallel>], iteration_bounds = array<i64: 1>, scalar_prefetch = 0 : i64, scratch_operands = 0 : i64, tpu.core_type = #tpu.core_type<tc>, window_params = [{transform_indices = @transform_0, window_bounds = array<i64: 16, 4>}, {pipeline_mode = #tpu.pipeline_mode<synchronous>, transform_indices = @transform_1, window_bounds = array<i64: 4, 128>}, {pipeline_mode = #tpu.pipeline_mode<synchronous>, transform_indices = @transform_2, window_bounds = array<i64: 1, 128>}, {pipeline_mode = #tpu.pipeline_mode<synchronous>, transform_indices = @transform_3, window_bounds = array<i64: 128, 128>}, {pipeline_mode = #tpu.pipeline_mode<synchronous>, transform_indices = @transform_4, window_bounds = array<i64: 1, 128>}, {pipeline_mode = #tpu.pipeline_mode<synchronous>, transform_indices = @transform_5, window_bounds = array<i64: 128, 32>}, {pipeline_mode = #tpu.pipeline_mode<synchronous>, transform_indices = @transform_6, window_bounds = array<i64: 1, 32>}, {transform_indices = @transform_7, window_bounds = array<i64: 16, 32>}]} {
    %c0 = arith.constant 0 : index
    %c0_0 = arith.constant 0 : index
    %0 = vector.load %arg1[%c0, %c0_0] : memref<16x4xf32, #tpu.memory_space<vmem>>, vector<16x4xf32>
    %c0_1 = arith.constant 0 : index
    %c0_2 = arith.constant 0 : index
    %1 = vector.load %arg2[%c0_1, %c0_2] : memref<4x128xf32, #tpu.memory_space<vmem>>, vector<4x128xf32>
    %cst = arith.constant dense<0.000000e+00> : vector<16x128xf32>
    %2 = tpu.matmul %0, %1, %cst {dimension_numbers = #tpu.dot_dimension_numbers<[1], [0], [0], [1], [0, 0, 1, 1], [], []>, precision = #tpu.contract_precision<fp32>} : vector<16x4xf32>, vector<4x128xf32>, vector<16x128xf32> -> vector<16x128xf32>
    %c0_3 = arith.constant 0 : index
    %c0_4 = arith.constant 0 : index
    %3 = vector.load %arg3[%c0_3, %c0_4] : memref<1x128xf32, #tpu.memory_space<vmem>>, vector<1x128xf32>
    %4 = vector.broadcast %3 : vector<1x128xf32> to vector<16x128xf32>
    %5 = arith.addf %2, %4 : vector<16x128xf32>
    %6 = math.tanh %5 : vector<16x128xf32>
    %c0_5 = arith.constant 0 : index
    %c0_6 = arith.constant 0 : index
    %7 = vector.load %arg4[%c0_5, %c0_6] : memref<128x128xf32, #tpu.memory_space<vmem>>, vector<128x128xf32>
    %cst_7 = arith.constant dense<0.000000e+00> : vector<16x128xf32>
    %8 = tpu.matmul %6, %7, %cst_7 {dimension_numbers = #tpu.dot_dimension_numbers<[1], [0], [0], [1], [0, 0, 1, 1], [], []>, precision = #tpu.contract_precision<fp32>} : vector<16x128xf32>, vector<128x128xf32>, vector<16x128xf32> -> vector<16x128xf32>
    %c0_8 = arith.constant 0 : index
    %c0_9 = arith.constant 0 : index
    %9 = vector.load %arg5[%c0_8, %c0_9] : memref<1x128xf32, #tpu.memory_space<vmem>>, vector<1x128xf32>
    %10 = vector.broadcast %9 : vector<1x128xf32> to vector<16x128xf32>
    %11 = arith.addf %8, %10 : vector<16x128xf32>
    %12 = math.tanh %11 : vector<16x128xf32>
    %c0_10 = arith.constant 0 : index
    %c0_11 = arith.constant 0 : index
    %13 = vector.load %arg6[%c0_10, %c0_11] : memref<128x32xf32, #tpu.memory_space<vmem>>, vector<128x32xf32>
    %cst_12 = arith.constant dense<0.000000e+00> : vector<16x32xf32>
    %14 = tpu.matmul %12, %13, %cst_12 {dimension_numbers = #tpu.dot_dimension_numbers<[1], [0], [0], [1], [0, 0, 1, 1], [], []>, precision = #tpu.contract_precision<fp32>} : vector<16x128xf32>, vector<128x32xf32>, vector<16x32xf32> -> vector<16x32xf32>
    %c0_13 = arith.constant 0 : index
    %c0_14 = arith.constant 0 : index
    %15 = vector.load %arg7[%c0_13, %c0_14] : memref<1x32xf32, #tpu.memory_space<vmem>>, vector<1x32xf32>
    %16 = vector.broadcast %15 : vector<1x32xf32> to vector<16x32xf32>
    %17 = arith.addf %14, %16 : vector<16x32xf32>
    %c0_15 = arith.constant 0 : index
    %c0_16 = arith.constant 0 : index
    %18 = vector.load %arg8[%c0_15, %c0_16] : memref<16x32xf32, #tpu.memory_space<vmem>>, vector<16x32xf32>
    tpu.vector_store %arg8[%c0_15, %c0_16], %17 {strides = array<i32>} : memref<16x32xf32, #tpu.memory_space<vmem>>, vector<16x32xf32>,
    return
  }
  func.func @transform_0(%arg0: i32) -> (i32, i32) {
    %c0_i32 = arith.constant 0 : i32
    %c0_i32_0 = arith.constant 0 : i32
    return %arg0, %c0_i32 : i32, i32
  }
  func.func @transform_1(%arg0: i32) -> (i32, i32) {
    %c0_i32 = arith.constant 0 : i32
    %c0_i32_0 = arith.constant 0 : i32
    %c0_i32_1 = arith.constant 0 : i32
    return %c0_i32, %c0_i32_0 : i32, i32
  }
  func.func @transform_2(%arg0: i32) -> (i32, i32) {
    %c0_i32 = arith.constant 0 : i32
    %c0_i32_0 = arith.constant 0 : i32
    %c0_i32_1 = arith.constant 0 : i32
    return %c0_i32, %c0_i32_0 : i32, i32
  }
  func.func @transform_3(%arg0: i32) -> (i32, i32) {
    %c0_i32 = arith.constant 0 : i32
    %c0_i32_0 = arith.constant 0 : i32
    %c0_i32_1 = arith.constant 0 : i32
    return %c0_i32, %c0_i32_0 : i32, i32
  }
  func.func @transform_4(%arg0: i32) -> (i32, i32) {
    %c0_i32 = arith.constant 0 : i32
    %c0_i32_0 = arith.constant 0 : i32
    %c0_i32_1 = arith.constant 0 : i32
    return %c0_i32, %c0_i32_0 : i32, i32
  }
  func.func @transform_5(%arg0: i32) -> (i32, i32) {
    %c0_i32 = arith.constant 0 : i32
    %c0_i32_0 = arith.constant 0 : i32
    %c0_i32_1 = arith.constant 0 : i32
    return %c0_i32, %c0_i32_0 : i32, i32
  }
  func.func @transform_6(%arg0: i32) -> (i32, i32) {
    %c0_i32 = arith.constant 0 : i32
    %c0_i32_0 = arith.constant 0 : i32
    %c0_i32_1 = arith.constant 0 : i32
    return %c0_i32, %c0_i32_0 : i32, i32
  }
  func.func @transform_7(%arg0: i32) -> (i32, i32) {
    %c0_i32 = arith.constant 0 : i32
    %c0_i32_0 = arith.constant 0 : i32
    return %arg0, %c0_i32 : i32, i32
  }
}

</mosaic_0001>

<llo_original>
// kernel: tpu_custom_call.1
$region0: #{tpu_custom_call.1}
  #allocation0 [shape = 'u32[]', space=smem, size = 0x4, offset = 0x4, fixed_abs, tag = 'smem constant byte address 0x4 - core index']
  #allocation1 [shape = 'u32[144,128]{1,0:T(1,128)}', space=vmem, size = 0x12000, scoped, tag = 'internal scratch']
  %s0 = inlined_call_operand.vmem [shape: f32[16,4], index: 0, kind: input, shape index: {}]
  %s1 = inlined_call_operand.vmem [shape: f32[4,128], index: 1, kind: input, shape index: {}]
  %s2 = inlined_call_operand.vmem [shape: f32[1,128], index: 2, kind: input, shape index: {}]
  %s3 = inlined_call_operand.vmem [shape: f32[128,128], index: 3, kind: input, shape index: {}]
  %s4 = inlined_call_operand.vmem [shape: f32[1,128], index: 4, kind: input, shape index: {}]
  %s5 = inlined_call_operand.vmem [shape: f32[128,32], index: 5, kind: input, shape index: {}]
  %s6 = inlined_call_operand.vmem [shape: f32[1,32], index: 6, kind: input, shape index: {}]
  %s7 = inlined_call_operand.hbm [shape: f32[16,32], index: 7, kind: output, shape index: {}]
  %s8 = sld [smem:[#allocation0]]
  $region38: #{tpu_custom_call.1} parent=0
    _
  %s10 = ssub.s32 1, %s8
  %s11 = scalar_select 0, %s10, %s8
  $region1: #{tpu_custom_call.1} parent=0
    #allocation2 [shape = 'u8[8192]{0}', space=vmem, size = 0x2000, scoped, tag = 'output window, operand 0, single buffered']
    #allocation3 [shape = 's32[1]{0}', space=sflag, size = 0x4, scoped, tag = 'scoped memory for tpu_custom_call.1']
    %12 = vsyncpa [#allocation3], 0
    // Predicated region
    $region2: #{tpu_custom_call.1} parent=1 // pred_check
      _
    $region3: #{tpu_custom_call.1} parent=1 // pred_check_branch
      %14 = sbr.rel (0) target = $region5
    $region4: #{tpu_custom_call.1} parent=1 // pred_region
      _
    $region5: #{tpu_custom_call.1} parent=1 // pred_fallthru
      _
    // Predicated region
    $region6: #{tpu_custom_call.1} parent=1 // pred_check
      _
    $region7: #{tpu_custom_call.1} parent=1 // pred_check_branch
      %16 = sbr.rel (0) target = $region9
    $region8: #{tpu_custom_call.1} parent=1 // pred_region
      _
    $region9: #{tpu_custom_call.1} parent=1 // pred_fallthru
      _
    // Predicated region
    $region10: #{tpu_custom_call.1} parent=1 // pred_check
      _
    $region11: #{tpu_custom_call.1} parent=1 // pred_check_branch
      %18 = sbr.rel (0) target = $region13
    $region12: #{tpu_custom_call.1} parent=1 // pred_region
      _
    $region13: #{tpu_custom_call.1} parent=1 // pred_fallthru
      _
    // Predicated region
    $region14: #{tpu_custom_call.1} parent=1 // pred_check
      _
    $region15: #{tpu_custom_call.1} parent=1 // pred_check_branch
      %20 = sbr.rel (0) target = $region17
    $region16: #{tpu_custom_call.1} parent=1 // pred_region
      _
    $region17: #{tpu_custom_call.1} parent=1 // pred_fallthru
      _
    // Predicated region
    $region18: #{tpu_custom_call.1} parent=1 // pred_check
      _
    $region19: #{tpu_custom_call.1} parent=1 // pred_check_branch
      %22 = sbr.rel (0) target = $region21
    $region20: #{tpu_custom_call.1} parent=1 // pred_region
      _
    $region21: #{tpu_custom_call.1} parent=1 // pred_fallthru
      _
    // Predicated region
    $region22: #{tpu_custom_call.1} parent=1 // pred_check
      _
    $region23: #{tpu_custom_call.1} parent=1 // pred_check_branch
      %24 = sbr.rel (0) target = $region25
    $region24: #{tpu_custom_call.1} parent=1 // pred_region
      _
    $region25: #{tpu_custom_call.1} parent=1 // pred_fallthru
      _
    // Predicated region
    $region26: #{tpu_custom_call.1} parent=1 // pred_check
      _
    $region27: #{tpu_custom_call.1} parent=1 // pred_check_branch
      %26 = sbr.rel (0) target = $region29
    $region28: #{tpu_custom_call.1} parent=1 // pred_region
      _
    $region29: #{tpu_custom_call.1} parent=1 // pred_fallthru
      _
    %v27 = vld [vmem:[%s0] sm:$0xff]
    %v28 = vld [vmem:[%s0 + $0x8] sm:$0xff]
    %v29 = vld [vmem:[%s1] sm:$0xf]
    %v30 = vld [vmem:[%s2] sm:$0x1]
    %v32 = vlaneseq
    %v33 = vshrl.u32 %v32, 7
    %v34 = vsub.s32 0, %v33
    %v35 = vrot.slane %v30, %v34
    %vm37 = vcmask 31744
    %v39 = vsel %vm37, %v27, 0
    %v42 = vsel %vm37, %v28, 0
    %vm44 = vcmask 1043456
    %v46 = vsel %vm44, %v29, 0
    %48 = vmatprep.subr.mxu0 0.0
    %v49 = vand.u32 %v46, 4294901760
    %50 = vmatpush1.msra.mxu0 %v49
    %51 = vmatprep.subr.mxu0 0.0
    %52 = vmatpush1.msra.mxu0 0.0
    %53 = vmatprep.subr.mxu0 0.0
    %54 = vmatpush1.msra.mxu0 0.0
    %55 = vmatprep.subr.mxu0 0.0
    %56 = vmatpush1.msra.mxu0 0.0
    %57 = vmatprep.subr.mxu0 0.0
    %58 = vmatpush1.msra.mxu0 0.0
    %59 = vmatprep.subr.mxu0 0.0
    %60 = vmatpush1.msra.mxu0 0.0
    %61 = vmatprep.subr.mxu0 0.0
    %62 = vmatpush1.msra.mxu0 0.0
    %63 = vmatprep.subr.mxu0 0.0
    %64 = vmatpush1.msra.mxu0 0.0
    %65 = vmatprep.subr.mxu0 0.0
    %66 = vmatpush1.msra.mxu0 0.0
    %67 = vmatprep.subr.mxu0 0.0
    %68 = vmatpush1.msra.mxu0 0.0
    %69 = vmatprep.subr.mxu0 0.0
    %70 = vmatpush1.msra.mxu0 0.0
    %71 = vmatprep.subr.mxu0 0.0
    %72 = vmatpush1.msra.mxu0 0.0
    %73 = vmatprep.subr.mxu0 0.0
    %74 = vmatpush1.msra.mxu0 0.0
    %75 = vmatprep.subr.mxu0 0.0
    %76 = vmatpush1.msra.mxu0 0.0
    %77 = vmatprep.subr.mxu0 0.0
    %78 = vmatpush1.msra.mxu0 0.0
    %79 = vmatprep.subr.mxu0 0.0
    %80 = vmatpush1.msra.mxu0 0.0
    %81 = vmatprep.subr.mxu0 0.0
    %82 = vmatpush1.msra.mxu0 0.0
    %83 = vmatprep.subr.mxu0 0.0
    %84 = vmatpush1.msra.mxu0 0.0
    %85 = vmatprep.subr.mxu0 0.0
    %86 = vmatpush1.msra.mxu0 0.0
    %87 = vmatprep.subr.mxu0 0.0
    %88 = vmatpush1.msra.mxu0 0.0
    %89 = vmatprep.subr.mxu0 0.0
    %90 = vmatpush1.msra.mxu0 0.0
    %91 = vmatprep.subr.mxu0 0.0
    %92 = vmatpush1.msra.mxu0 0.0
    %93 = vmatprep.subr.mxu0 0.0
    %94 = vmatpush1.msra.mxu0 0.0
    %95 = vmatprep.subr.mxu0 0.0
    %96 = vmatpush1.msra.mxu0 0.0
    %97 = vmatprep.subr.mxu0 0.0
    %98 = vmatpush1.msra.mxu0 0.0
    %99 = vmatprep.subr.mxu0 0.0
    %100 = vmatpush1.msra.mxu0 0.0
    %101 = vmatprep.subr.mxu0 0.0
    %102 = vmatpush1.msra.mxu0 0.0
    %103 = vmatprep.subr.mxu0 0.0
    %104 = vmatpush1.msra.mxu0 0.0
    %105 = vmatprep.subr.mxu0 0.0
    %106 = vmatpush1.msra.mxu0 0.0
    %107 = vmatprep.subr.mxu0 0.0
    %108 = vmatpush1.msra.mxu0 0.0
    %109 = vmatprep.subr.mxu0 0.0
    %110 = vmatpush1.msra.mxu0 0.0
    %111 = vmatprep.subr.mxu0 0.0
    %112 = vmatpush1.msra.mxu0 0.0
    %113 = vmatprep.mubr.f32.mxu0 0.0
    %v114 = vand.u32 %v39, 4294901760
    %v115 = vsub.f32 %v39, %v114
    %v116 = vand.u32 %v115, 4294901760
    %v117 = vsub.f32 %v115, %v116
    %v118 = vand.u32 %v117, 4294901760
    %119 = vmatmul.mubr.f32.gmra.mrb[0].mxu0 %v118
    %v120 = vpop.f32.mrb[0].mxu0
    %v121 = vadd.f32 %v35, %v120
    %v122 = vpop.f32.mrb[0].mxu0
    %123 = vmatprep.mubr.f32.mxu0 0.0
    %v124 = vand.u32 %v42, 4294901760
    %v125 = vsub.f32 %v42, %v124
    %v126 = vand.u32 %v125, 4294901760
    %v127 = vsub.f32 %v125, %v126
    %v128 = vand.u32 %v127, 4294901760
    %129 = vmatmul.mubr.f32.gmra.mrb[0].mxu0 %v128
    %v130 = vpop.f32.mrb[0].mxu0
    %v131 = vadd.f32 %v35, %v130
    %v132 = vpop.f32.mrb[0].mxu0
    %133 = vdwg.mxu0
    %134 = vmatprep.subr.mxu0 0.0
    %v135 = vand.u32 %v46, 4294901760
    %v136 = vsub.f32 %v46, %v135
    %v137 = vand.u32 %v136, 4294901760
    %v138 = vsub.f32 %v136, %v137
    %v139 = vand.u32 %v138, 4294901760
    %140 = vmatpush1.msra.mxu0 %v139
    %141 = vmatprep.subr.mxu0 0.0
    %142 = vmatpush1.msra.mxu0 0.0
    %143 = vmatprep.subr.mxu0 0.0
    %144 = vmatpush1.msra.mxu0 0.0
    %145 = vmatprep.subr.mxu0 0.0
    %146 = vmatpush1.msra.mxu0 0.0
    %147 = vmatprep.subr.mxu0 0.0
    %148 = vmatpush1.msra.mxu0 0.0
    %149 = vmatprep.subr.mxu0 0.0
    %150 = vmatpush1.msra.mxu0 0.0
    %151 = vmatprep.subr.mxu0 0.0
    %152 = vmatpush1.msra.mxu0 0.0
    %153 = vmatprep.subr.mxu0 0.0
    %154 = vmatpush1.msra.mxu0 0.0
    %155 = vmatprep.subr.mxu0 0.0
    %156 = vmatpush1.msra.mxu0 0.0
    %157 = vmatprep.subr.mxu0 0.0
    %158 = vmatpush1.msra.mxu0 0.0
    %159 = vmatprep.subr.mxu0 0.0
    %160 = vmatpush1.msra.mxu0 0.0
    %161 = vmatprep.subr.mxu0 0.0
    %162 = vmatpush1.msra.mxu0 0.0
    %163 = vmatprep.subr.mxu0 0.0
    %164 = vmatpush1.msra.mxu0 0.0
    %165 = vmatprep.subr.mxu0 0.0
    %166 = vmatpush1.msra.mxu0 0.0
    %167 = vmatprep.subr.mxu0 0.0
    %168 = vmatpush1.msra.mxu0 0.0
    %169 = vmatprep.subr.mxu0 0.0
    %170 = vmatpush1.msra.mxu0 0.0
    %171 = vmatprep.subr.mxu0 0.0
    %172 = vmatpush1.msra.mxu0 0.0
    %173 = vmatprep.subr.mxu0 0.0
    %174 = vmatpush1.msra.mxu0 0.0
    %175 = vmatprep.subr.mxu0 0.0
    %176 = vmatpush1.msra.mxu0 0.0
    %177 = vmatprep.subr.mxu0 0.0
    %178 = vmatpush1.msra.mxu0 0.0
    %179 = vmatprep.subr.mxu0 0.0
    %180 = vmatpush1.msra.mxu0 0.0
    %181 = vmatprep.subr.mxu0 0.0
    %182 = vmatpush1.msra.mxu0 0.0
    %183 = vmatprep.subr.mxu0 0.0
    %184 = vmatpush1.msra.mxu0 0.0
    %185 = vmatprep.subr.mxu0 0.0
    %186 = vmatpush1.msra.mxu0 0.0
    %187 = vmatprep.subr.mxu0 0.0
    %188 = vmatpush1.msra.mxu0 0.0
    %189 = vmatprep.subr.mxu0 0.0
    %190 = vmatpush1.msra.mxu0 0.0
    %191 = vmatprep.subr.mxu0 0.0
    %192 = vmatpush1.msra.mxu0 0.0
    %193 = vmatprep.subr.mxu0 0.0
    %194 = vmatpush1.msra.mxu0 0.0
    %195 = vmatprep.subr.mxu0 0.0
    %196 = vmatpush1.msra.mxu0 0.0
    %197 = vmatprep.subr.mxu0 0.0
    %198 = vmatpush1.msra.mxu0 0.0
    %199 = vmatprep.subr.mxu0 0.0
    %200 = vmatpush1.msra.mxu0 0.0
    %201 = vmatprep.subr.mxu0 0.0
    %202 = vmatpush1.msra.mxu0 0.0
    %203 = vmatprep.mubr.f32.mxu0 0.0
    %v204 = vand.u32 %v39, 4294901760
    %205 = vmatmul.mubr.f32.gmra.mrb[0].mxu0 %v204
    %v206 = vpop.f32.mrb[0].mxu0
    %v207 = vadd.f32 %v121, %v206
    %v208 = vpop.f32.mrb[0].mxu0
    %209 = vmatprep.mubr.f32.mxu0 0.0
    %v210 = vand.u32 %v42, 4294901760
    %211 = vmatmul.mubr.f32.gmra.mrb[0].mxu0 %v210
    %v212 = vpop.f32.mrb[0].mxu0
    %v213 = vadd.f32 %v131, %v212
    %v214 = vpop.f32.mrb[0].mxu0
    %215 = vdwg.mxu0
    %216 = vmatprep.subr.mxu0 0.0
    %v217 = vand.u32 %v46, 4294901760
    %v218 = vsub.f32 %v46, %v217
    %219 = vmatpush1.msra.mxu0 %v218
    %220 = vmatprep.subr.mxu0 0.0
    %221 = vmatpush1.msra.mxu0 0.0
    %222 = vmatprep.subr.mxu0 0.0
    %223 = vmatpush1.msra.mxu0 0.0
    %224 = vmatprep.subr.mxu0 0.0
    %225 = vmatpush1.msra.mxu0 0.0
    %226 = vmatprep.subr.mxu0 0.0
    %227 = vmatpush1.msra.mxu0 0.0
    %228 = vmatprep.subr.mxu0 0.0
    %229 = vmatpush1.msra.mxu0 0.0
    %230 = vmatprep.subr.mxu0 0.0
    %231 = vmatpush1.msra.mxu0 0.0
    %232 = vmatprep.subr.mxu0 0.0
    %233 = vmatpush1.msra.mxu0 0.0
    %234 = vmatprep.subr.mxu0 0.0
    %235 = vmatpush1.msra.mxu0 0.0
    %236 = vmatprep.subr.mxu0 0.0
    %237 = vmatpush1.msra.mxu0 0.0
    %238 = vmatprep.subr.mxu0 0.0
    %239 = vmatpush1.msra.mxu0 0.0
    %240 = vmatprep.subr.mxu0 0.0
    %241 = vmatpush1.msra.mxu0 0.0
    %242 = vmatprep.subr.mxu0 0.0
    %243 = vmatpush1.msra.mxu0 0.0
    %244 = vmatprep.subr.mxu0 0.0
    %245 = vmatpush1.msra.mxu0 0.0
    %246 = vmatprep.subr.mxu0 0.0
    %247 = vmatpush1.msra.mxu0 0.0
    %248 = vmatprep.subr.mxu0 0.0
    %249 = vmatpush1.msra.mxu0 0.0
    %250 = vmatprep.subr.mxu0 0.0
    %251 = vmatpush1.msra.mxu0 0.0
    %252 = vmatprep.subr.mxu0 0.0
    %253 = vmatpush1.msra.mxu0 0.0
    %254 = vmatprep.subr.mxu0 0.0
    %255 = vmatpush1.msra.mxu0 0.0
    %256 = vmatprep.subr.mxu0 0.0
    %257 = vmatpush1.msra.mxu0 0.0
    %258 = vmatprep.subr.mxu0 0.0
    %259 = vmatpush1.msra.mxu0 0.0
    %260 = vmatprep.subr.mxu0 0.0
    %261 = vmatpush1.msra.mxu0 0.0
    %262 = vmatprep.subr.mxu0 0.0
    %263 = vmatpush1.msra.mxu0 0.0
    %264 = vmatprep.subr.mxu0 0.0
    %265 = vmatpush1.msra.mxu0 0.0
    %266 = vmatprep.subr.mxu0 0.0
    %267 = vmatpush1.msra.mxu0 0.0
    %268 = vmatprep.subr.mxu0 0.0
    %269 = vmatpush1.msra.mxu0 0.0
    %270 = vmatprep.subr.mxu0 0.0
    %271 = vmatpush1.msra.mxu0 0.0
    %272 = vmatprep.subr.mxu0 0.0
    %273 = vmatpush1.msra.mxu0 0.0
    %274 = vmatprep.subr.mxu0 0.0
    %275 = vmatpush1.msra.mxu0 0.0
    %276 = vmatprep.subr.mxu0 0.0
    %277 = vmatpush1.msra.mxu0 0.0
    %278 = vmatprep.subr.mxu0 0.0
    %279 = vmatpush1.msra.mxu0 0.0
    %280 = vmatprep.subr.mxu0 0.0
    %281 = vmatpush1.msra.mxu0 0.0
    %282 = vmatprep.mubr.f32.mxu0 0.0
    %v283 = vand.u32 %v39, 4294901760
    %v284 = vsub.f32 %v39, %v283
    %285 = vmatmul.mubr.f32.gmra.mrb[0].mxu0 %v284
    %v286 = vpop.f32.mrb[0].mxu0
    %v287 = vadd.f32 %v207, %v286
    %v288 = vpop.f32.mrb[0].mxu0
    %289 = vmatprep.mubr.f32.mxu0 0.0
    %v290 = vand.u32 %v42, 4294901760
    %v291 = vsub.f32 %v42, %v290
    %292 = vmatmul.mubr.f32.gmra.mrb[0].mxu0 %v291
    %v293 = vpop.f32.mrb[0].mxu0
    %v294 = vadd.f32 %v213, %v293
    %v295 = vpop.f32.mrb[0].mxu0
    %296 = vdwg.mxu0
    %297 = vmatprep.subr.mxu0 0.0
    %v298 = vand.u32 %v46, 4294901760
    %299 = vmatpush1.msra.mxu0 %v298
    %300 = vmatprep.subr.mxu0 0.0
    %301 = vmatpush1.msra.mxu0 0.0
    %302 = vmatprep.subr.mxu0 0.0
    %303 = vmatpush1.msra.mxu0 0.0
    %304 = vmatprep.subr.mxu0 0.0
    %305 = vmatpush1.msra.mxu0 0.0
    %306 = vmatprep.subr.mxu0 0.0
    %307 = vmatpush1.msra.mxu0 0.0
    %308 = vmatprep.subr.mxu0 0.0
    %309 = vmatpush1.msra.mxu0 0.0
    %310 = vmatprep.subr.mxu0 0.0
    %311 = vmatpush1.msra.mxu0 0.0
    %312 = vmatprep.subr.mxu0 0.0
    %313 = vmatpush1.msra.mxu0 0.0
    %314 = vmatprep.subr.mxu0 0.0
    %315 = vmatpush1.msra.mxu0 0.0
    %316 = vmatprep.subr.mxu0 0.0
    %317 = vmatpush1.msra.mxu0 0.0
    %318 = vmatprep.subr.mxu0 0.0
    %319 = vmatpush1.msra.mxu0 0.0
    %320 = vmatprep.subr.mxu0 0.0
    %321 = vmatpush1.msra.mxu0 0.0
    %322 = vmatprep.subr.mxu0 0.0
    %323 = vmatpush1.msra.mxu0 0.0
    %324 = vmatprep.subr.mxu0 0.0
    %325 = vmatpush1.msra.mxu0 0.0
    %326 = vmatprep.subr.mxu0 0.0
    %327 = vmatpush1.msra.mxu0 0.0
    %328 = vmatprep.subr.mxu0 0.0
    %329 = vmatpush1.msra.mxu0 0.0
    %330 = vmatprep.subr.mxu0 0.0
    %331 = vmatpush1.msra.mxu0 0.0
    %332 = vmatprep.subr.mxu0 0.0
    %333 = vmatpush1.msra.mxu0 0.0
    %334 = vmatprep.subr.mxu0 0.0
    %335 = vmatpush1.msra.mxu0 0.0
    %336 = vmatprep.subr.mxu0 0.0
    %337 = vmatpush1.msra.mxu0 0.0
    %338 = vmatprep.subr.mxu0 0.0
    %339 = vmatpush1.msra.mxu0 0.0
    %340 = vmatprep.subr.mxu0 0.0
    %341 = vmatpush1.msra.mxu0 0.0
    %342 = vmatprep.subr.mxu0 0.0
    %343 = vmatpush1.msra.mxu0 0.0
    %344 = vmatprep.subr.mxu0 0.0
    %345 = vmatpush1.msra.mxu0 0.0
    %346 = vmatprep.subr.mxu0 0.0
    %347 = vmatpush1.msra.mxu0 0.0
    %348 = vmatprep.subr.mxu0 0.0
    %349 = vmatpush1.msra.mxu0 0.0
    %350 = vmatprep.subr.mxu0 0.0
    %351 = vmatpush1.msra.mxu0 0.0
    %352 = vmatprep.subr.mxu0 0.0
    %353 = vmatpush1.msra.mxu0 0.0
    %354 = vmatprep.subr.mxu0 0.0
    %355 = vmatpush1.msra.mxu0 0.0
    %356 = vmatprep.subr.mxu0 0.0
    %357 = vmatpush1.msra.mxu0 0.0
    %358 = vmatprep.subr.mxu0 0.0
    %359 = vmatpush1.msra.mxu0 0.0
    %360 = vmatprep.subr.mxu0 0.0
    %361 = vmatpush1.msra.mxu0 0.0
    %362 = vmatprep.mubr.f32.mxu0 0.0
    %v363 = vand.u32 %v39, 4294901760
    %v364 = vsub.f32 %v39, %v363
    %v365 = vand.u32 %v364, 4294901760
    %366 = vmatmul.mubr.f32.gmra.mrb[0].mxu0 %v365
    %v367 = vpop.f32.mrb[0].mxu0
    %v368 = vadd.f32 %v287, %v367
    %v369 = vpop.f32.mrb[0].mxu0
    %370 = vmatprep.mubr.f32.mxu0 0.0
    %v371 = vand.u32 %v42, 4294901760
    %v372 = vsub.f32 %v42, %v371
    %v373 = vand.u32 %v372, 4294901760
    %374 = vmatmul.mubr.f32.gmra.mrb[0].mxu0 %v373
    %v375 = vpop.f32.mrb[0].mxu0
    %v376 = vadd.f32 %v294, %v375
    %v377 = vpop.f32.mrb[0].mxu0
    %378 = vdwg.mxu0
    %379 = vmatprep.subr.mxu0 0.0
    %v380 = vand.u32 %v46, 4294901760
    %v381 = vsub.f32 %v46, %v380
    %v382 = vand.u32 %v381, 4294901760
    %383 = vmatpush1.msra.mxu0 %v382
    %384 = vmatprep.subr.mxu0 0.0
    %385 = vmatpush1.msra.mxu0 0.0
    %386 = vmatprep.subr.mxu0 0.0
    %387 = vmatpush1.msra.mxu0 0.0
    %388 = vmatprep.subr.mxu0 0.0
    %389 = vmatpush1.msra.mxu0 0.0
    %390 = vmatprep.subr.mxu0 0.0
    %391 = vmatpush1.msra.mxu0 0.0
    %392 = vmatprep.subr.mxu0 0.0
    %393 = vmatpush1.msra.mxu0 0.0
    %394 = vmatprep.subr.mxu0 0.0
    %395 = vmatpush1.msra.mxu0 0.0
    %396 = vmatprep.subr.mxu0 0.0
    %397 = vmatpush1.msra.mxu0 0.0
    %398 = vmatprep.subr.mxu0 0.0
    %399 = vmatpush1.msra.mxu0 0.0
    %400 = vmatprep.subr.mxu0 0.0
    %401 = vmatpush1.msra.mxu0 0.0
    %402 = vmatprep.subr.mxu0 0.0
    %403 = vmatpush1.msra.mxu0 0.0
    %404 = vmatprep.subr.mxu0 0.0
    %405 = vmatpush1.msra.mxu0 0.0
    %406 = vmatprep.subr.mxu0 0.0
    %407 = vmatpush1.msra.mxu0 0.0
    %408 = vmatprep.subr.mxu0 0.0
    %409 = vmatpush1.msra.mxu0 0.0
    %410 = vmatprep.subr.mxu0 0.0
    %411 = vmatpush1.msra.mxu0 0.0
    %412 = vmatprep.subr.mxu0 0.0
    %413 = vmatpush1.msra.mxu0 0.0
    %414 = vmatprep.subr.mxu0 0.0
    %415 = vmatpush1.msra.mxu0 0.0
    %416 = vmatprep.subr.mxu0 0.0
    %417 = vmatpush1.msra.mxu0 0.0
    %418 = vmatprep.subr.mxu0 0.0
    %419 = vmatpush1.msra.mxu0 0.0
    %420 = vmatprep.subr.mxu0 0.0
    %421 = vmatpush1.msra.mxu0 0.0
    %422 = vmatprep.subr.mxu0 0.0
    %423 = vmatpush1.msra.mxu0 0.0
    %424 = vmatprep.subr.mxu0 0.0
    %425 = vmatpush1.msra.mxu0 0.0
    %426 = vmatprep.subr.mxu0 0.0
    %427 = vmatpush1.msra.mxu0 0.0
    %428 = vmatprep.subr.mxu0 0.0
    %429 = vmatpush1.msra.mxu0 0.0
    %430 = vmatprep.subr.mxu0 0.0
    %431 = vmatpush1.msra.mxu0 0.0
    %432 = vmatprep.subr.mxu0 0.0
    %433 = vmatpush1.msra.mxu0 0.0
    %434 = vmatprep.subr.mxu0 0.0
    %435 = vmatpush1.msra.mxu0 0.0
    %436 = vmatprep.subr.mxu0 0.0
    %437 = vmatpush1.msra.mxu0 0.0
    %438 = vmatprep.subr.mxu0 0.0
    %439 = vmatpush1.msra.mxu0 0.0
    %440 = vmatprep.subr.mxu0 0.0
    %441 = vmatpush1.msra.mxu0 0.0
    %442 = vmatprep.subr.mxu0 0.0
    %443 = vmatpush1.msra.mxu0 0.0
    %444 = vmatprep.subr.mxu0 0.0
    %445 = vmatpush1.msra.mxu0 0.0
    %446 = vmatprep.mubr.f32.mxu0 0.0
    %v447 = vand.u32 %v39, 4294901760
    %448 = vmatmul.mubr.f32.gmra.mrb[0].mxu0 %v447
    %v449 = vpop.f32.mrb[0].mxu0
    %v450 = vadd.f32 %v368, %v449
    %v451 = vpop.f32.mrb[0].mxu0
    %452 = vmatprep.mubr.f32.mxu0 0.0
    %v453 = vand.u32 %v42, 4294901760
    %454 = vmatmul.mubr.f32.gmra.mrb[0].mxu0 %v453
    %v455 = vpop.f32.mrb[0].mxu0
    %v456 = vadd.f32 %v376, %v455
    %v457 = vpop.f32.mrb[0].mxu0
    %458 = vdwg.mxu0
    %459 = vmatprep.subr.mxu0 0.0
    %v460 = vand.u32 %v46, 4294901760
    %461 = vmatpush1.msra.mxu0 %v460
    %462 = vmatprep.subr.mxu0 0.0
    %463 = vmatpush1.msra.mxu0 0.0
    %464 = vmatprep.subr.mxu0 0.0
    %465 = vmatpush1.msra.mxu0 0.0
    %466 = vmatprep.subr.mxu0 0.0
    %467 = vmatpush1.msra.mxu0 0.0
    %468 = vmatprep.subr.mxu0 0.0
    %469 = vmatpush1.msra.mxu0 0.0
    %470 = vmatprep.subr.mxu0 0.0
    %471 = vmatpush1.msra.mxu0 0.0
    %472 = vmatprep.subr.mxu0 0.0
    %473 = vmatpush1.msra.mxu0 0.0
    %474 = vmatprep.subr.mxu0 0.0
    %475 = vmatpush1.msra.mxu0 0.0
    %476 = vmatprep.subr.mxu0 0.0
    %477 = vmatpush1.msra.mxu0 0.0
    %478 = vmatprep.subr.mxu0 0.0
    %479 = vmatpush1.msra.mxu0 0.0
    %480 = vmatprep.subr.mxu0 0.0
    %481 = vmatpush1.msra.mxu0 0.0
    %482 = vmatprep.subr.mxu0 0.0
    %483 = vmatpush1.msra.mxu0 0.0
    %484 = vmatprep.subr.mxu0 0.0
    %485 = vmatpush1.msra.mxu0 0.0
    %486 = vmatprep.subr.mxu0 0.0
    %487 = vmatpush1.msra.mxu0 0.0
    %488 = vmatprep.subr.mxu0 0.0
    %489 = vmatpush1.msra.mxu0 0.0
    %490 = vmatprep.subr.mxu0 0.0
    %491 = vmatpush1.msra.mxu0 0.0
    %492 = vmatprep.subr.mxu0 0.0
    %493 = vmatpush1.msra.mxu0 0.0
    %494 = vmatprep.subr.mxu0 0.0
    %495 = vmatpush1.msra.mxu0 0.0
    %496 = vmatprep.subr.mxu0 0.0
    %497 = vmatpush1.msra.mxu0 0.0
    %498 = vmatprep.subr.mxu0 0.0
    %499 = vmatpush1.msra.mxu0 0.0
    %500 = vmatprep.subr.mxu0 0.0
    %501 = vmatpush1.msra.mxu0 0.0
    %502 = vmatprep.subr.mxu0 0.0
    %503 = vmatpush1.msra.mxu0 0.0
    %504 = vmatprep.subr.mxu0 0.0
    %505 = vmatpush1.msra.mxu0 0.0
    %506 = vmatprep.subr.mxu0 0.0
    %507 = vmatpush1.msra.mxu0 0.0
    %508 = vmatprep.subr.mxu0 0.0
    %509 = vmatpush1.msra.mxu0 0.0
    %510 = vmatprep.subr.mxu0 0.0
    %511 = vmatpush1.msra.mxu0 0.0
    %512 = vmatprep.subr.mxu0 0.0
    %513 = vmatpush1.msra.mxu0 0.0
    %514 = vmatprep.subr.mxu0 0.0
    %515 = vmatpush1.msra.mxu0 0.0
    %516 = vmatprep.subr.mxu0 0.0
    %517 = vmatpush1.msra.mxu0 0.0
    %518 = vmatprep.subr.mxu0 0.0
    %519 = vmatpush1.msra.mxu0 0.0
    %520 = vmatprep.subr.mxu0 0.0
    %521 = vmatpush1.msra.mxu0 0.0
    %522 = vmatprep.subr.mxu0 0.0
    %523 = vmatpush1.msra.mxu0 0.0
    %524 = vmatprep.mubr.f32.mxu0 0.0
    %v525 = vand.u32 %v39, 4294901760
    %526 = vmatmul.mubr.f32.gmra.mrb[0].mxu0 %v525
    %v527 = vpop.f32.mrb[0].mxu0
    %v528 = vadd.f32 %v450, %v527
    %v529 = vpop.f32.mrb[0].mxu0
    %530 = vmatprep.mubr.f32.mxu0 0.0
    %v531 = vand.u32 %v42, 4294901760
    %532 = vmatmul.mubr.f32.gmra.mrb[0].mxu0 %v531
    %v533 = vpop.f32.mrb[0].mxu0
    %v534 = vadd.f32 %v456, %v533
    %v535 = vpop.f32.mrb[0].mxu0
    %536 = vdwg.mxu0
    %v537 = vtanh.pop %v528
    %v538 = vtanh.pop %v534
    %v539 = vld [vmem:[%s3] sm:$0xff]
    %v540 = vld [vmem:[%s3 + $0x8] sm:$0xff]
    %v541 = vld [vmem:[%s3 + $0x10] sm:$0xff]
    %v542 = vld [vmem:[%s3 + $0x18] sm:$0xff]
    %v543 = vld [vmem:[%s3 + $0x20] sm:$0xff]
    %v544 = vld [vmem:[%s3 + $0x28] sm:$0xff]
    %v545 = vld [vmem:[%s3 + $0x30] sm:$0xff]
    %v546 = vld [vmem:[%s3 + $0x38] sm:$0xff]
    %v547 = vld [vmem:[%s3 + $0x40] sm:$0xff]
    %v548 = vld [vmem:[%s3 + $0x48] sm:$0xff]
    %v549 = vld [vmem:[%s3 + $0x50] sm:$0xff]
    %v550 = vld [vmem:[%s3 + $0x58] sm:$0xff]
    %v551 = vld [vmem:[%s3 + $0x60] sm:$0xff]
    %v552 = vld [vmem:[%s3 + $0x68] sm:$0xff]
    %v553 = vld [vmem:[%s3 + $0x70] sm:$0xff]
    %v554 = vld [vmem:[%s3 + $0x78] sm:$0xff]
    %v555 = vld [vmem:[%s4] sm:$0x1]
    %v557 = vlaneseq
    %v558 = vshrl.u32 %v557, 7
    %v559 = vsub.s32 0, %v558
    %v560 = vrot.slane %v555, %v559
    %562 = vmatprep.subr.mxu0 0.0
    %v563 = vand.u32 %v539, 4294901760
    %564 = vmatpush1.msra.mxu0 %v563
    %565 = vmatprep.subr.mxu0 0.0
    %v566 = vand.u32 %v540, 4294901760
    %567 = vmatpush1.msra.mxu0 %v566
    %568 = vmatprep.subr.mxu0 0.0
    %v569 = vand.u32 %v541, 4294901760
    %570 = vmatpush1.msra.mxu0 %v569
    %571 = vmatprep.subr.mxu0 0.0
    %v572 = vand.u32 %v542, 4294901760
    %573 = vmatpush1.msra.mxu0 %v572
    %574 = vmatprep.subr.mxu0 0.0
    %v575 = vand.u32 %v543, 4294901760
    %576 = vmatpush1.msra.mxu0 %v575
    %577 = vmatprep.subr.mxu0 0.0
    %v578 = vand.u32 %v544, 4294901760
    %579 = vmatpush1.msra.mxu0 %v578
    %580 = vmatprep.subr.mxu0 0.0
    %v581 = vand.u32 %v545, 4294901760
    %582 = vmatpush1.msra.mxu0 %v581
    %583 = vmatprep.subr.mxu0 0.0
    %v584 = vand.u32 %v546, 4294901760
    %585 = vmatpush1.msra.mxu0 %v584
    %586 = vmatprep.subr.mxu0 0.0
    %v587 = vand.u32 %v547, 4294901760
    %588 = vmatpush1.msra.mxu0 %v587
    %589 = vmatprep.subr.mxu0 0.0
    %v590 = vand.u32 %v548, 4294901760
    %591 = vmatpush1.msra.mxu0 %v590
    %592 = vmatprep.subr.mxu0 0.0
    %v593 = vand.u32 %v549, 4294901760
    %594 = vmatpush1.msra.mxu0 %v593
    %595 = vmatprep.subr.mxu0 0.0
    %v596 = vand.u32 %v550, 4294901760
    %597 = vmatpush1.msra.mxu0 %v596
    %598 = vmatprep.subr.mxu0 0.0
    %v599 = vand.u32 %v551, 4294901760
    %600 = vmatpush1.msra.mxu0 %v599
    %601 = vmatprep.subr.mxu0 0.0
    %v602 = vand.u32 %v552, 4294901760
    %603 = vmatpush1.msra.mxu0 %v602
    %604 = vmatprep.subr.mxu0 0.0
    %v605 = vand.u32 %v553, 4294901760
    %606 = vmatpush1.msra.mxu0 %v605
    %607 = vmatprep.subr.mxu0 0.0
    %v608 = vand.u32 %v554, 4294901760
    %609 = vmatpush1.msra.mxu0 %v608
    %610 = vmatprep.subr.mxu0 0.0
    %611 = vmatpush1.msra.mxu0 0.0
    %612 = vmatprep.subr.mxu0 0.0
    %613 = vmatpush1.msra.mxu0 0.0
    %614 = vmatprep.subr.mxu0 0.0
    %615 = vmatpush1.msra.mxu0 0.0
    %616 = vmatprep.subr.mxu0 0.0
    %617 = vmatpush1.msra.mxu0 0.0
    %618 = vmatprep.subr.mxu0 0.0
    %619 = vmatpush1.msra.mxu0 0.0
    %620 = vmatprep.subr.mxu0 0.0
    %621 = vmatpush1.msra.mxu0 0.0
    %622 = vmatprep.subr.mxu0 0.0
    %623 = vmatpush1.msra.mxu0 0.0
    %624 = vmatprep.subr.mxu0 0.0
    %625 = vmatpush1.msra.mxu0 0.0
    %626 = vmatprep.subr.mxu0 0.0
    %627 = vmatpush1.msra.mxu0 0.0
    %628 = vmatprep.subr.mxu0 0.0
    %629 = vmatpush1.msra.mxu0 0.0
    %630 = vmatprep.subr.mxu0 0.0
    %631 = vmatpush1.msra.mxu0 0.0
    %632 = vmatprep.subr.mxu0 0.0
    %633 = vmatpush1.msra.mxu0 0.0
    %634 = vmatprep.subr.mxu0 0.0
    %635 = vmatpush1.msra.mxu0 0.0
    %636 = vmatprep.subr.mxu0 0.0
    %637 = vmatpush1.msra.mxu0 0.0
    %638 = vmatprep.subr.mxu0 0.0
    %639 = vmatpush1.msra.mxu0 0.0
    %640 = vmatprep.subr.mxu0 0.0
    %641 = vmatpush1.msra.mxu0 0.0
    %642 = vmatprep.mubr.f32.mxu0 0.0
    %v643 = vand.u32 %v537, 4294901760
    %v644 = vsub.f32 %v537, %v643
    %v645 = vand.u32 %v644, 4294901760
    %v646 = vsub.f32 %v644, %v645
    %v647 = vand.u32 %v646, 4294901760
    %648 = vmatmul.mubr.f32.gmra.mrb[0].mxu0 %v647
    %v649 = vpop.f32.mrb[0].mxu0
    %v650 = vadd.f32 %v560, %v649
    %v651 = vpop.f32.mrb[0].mxu0
    %652 = vmatprep.mubr.f32.mxu0 0.0
    %v653 = vand.u32 %v538, 4294901760
    %v654 = vsub.f32 %v538, %v653
    %v655 = vand.u32 %v654, 4294901760
    %v656 = vsub.f32 %v654, %v655
    %v657 = vand.u32 %v656, 4294901760
    %658 = vmatmul.mubr.f32.gmra.mrb[0].mxu0 %v657
    %v659 = vpop.f32.mrb[0].mxu0
    %v660 = vadd.f32 %v560, %v659
    %v661 = vpop.f32.mrb[0].mxu0
    %662 = vdwg.mxu0
    %663 = vmatprep.subr.mxu0 0.0
    %v664 = vand.u32 %v539, 4294901760
    %v665 = vsub.f32 %v539, %v664
    %v666 = vand.u32 %v665, 4294901760
    %v667 = vsub.f32 %v665, %v666
    %v668 = vand.u32 %v667, 4294901760
    %669 = vmatpush1.msra.mxu0 %v668
    %670 = vmatprep.subr.mxu0 0.0
    %v671 = vand.u32 %v540, 4294901760
    %v672 = vsub.f32 %v540, %v671
    %v673 = vand.u32 %v672, 4294901760
    %v674 = vsub.f32 %v672, %v673
    %v675 = vand.u32 %v674, 4294901760
    %676 = vmatpush1.msra.mxu0 %v675
    %677 = vmatprep.subr.mxu0 0.0
    %v678 = vand.u32 %v541, 4294901760
    %v679 = vsub.f32 %v541, %v678
    %v680 = vand.u32 %v679, 4294901760
    %v681 = vsub.f32 %v679, %v680
    %v682 = vand.u32 %v681, 4294901760
    %683 = vmatpush1.msra.mxu0 %v682
    %684 = vmatprep.subr.mxu0 0.0
    %v685 = vand.u32 %v542, 4294901760
    %v686 = vsub.f32 %v542, %v685
    %v687 = vand.u32 %v686, 4294901760
    %v688 = vsub.f32 %v686, %v687
    %v689 = vand.u32 %v688, 4294901760
    %690 = vmatpush1.msra.mxu0 %v689
    %691 = vmatprep.subr.mxu0 0.0
    %v692 = vand.u32 %v543, 4294901760
    %v693 = vsub.f32 %v543, %v692
    %v694 = vand.u32 %v693, 4294901760
    %v695 = vsub.f32 %v693, %v694
    %v696 = vand.u32 %v695, 4294901760
    %697 = vmatpush1.msra.mxu0 %v696
    %698 = vmatprep.subr.mxu0 0.0
    %v699 = vand.u32 %v544, 4294901760
    %v700 = vsub.f32 %v544, %v699
    %v701 = vand.u32 %v700, 4294901760
    %v702 = vsub.f32 %v700, %v701
    %v703 = vand.u32 %v702, 4294901760
    %704 = vmatpush1.msra.mxu0 %v703
    %705 = vmatprep.subr.mxu0 0.0
    %v706 = vand.u32 %v545, 4294901760
    %v707 = vsub.f32 %v545, %v706
    %v708 = vand.u32 %v707, 4294901760
    %v709 = vsub.f32 %v707, %v708
    %v710 = vand.u32 %v709, 4294901760
    %711 = vmatpush1.msra.mxu0 %v710
    %712 = vmatprep.subr.mxu0 0.0
    %v713 = vand.u32 %v546, 4294901760
    %v714 = vsub.f32 %v546, %v713
    %v715 = vand.u32 %v714, 4294901760
    %v716 = vsub.f32 %v714, %v715
    %v717 = vand.u32 %v716, 4294901760
    %718 = vmatpush1.msra.mxu0 %v717
    %719 = vmatprep.subr.mxu0 0.0
    %v720 = vand.u32 %v547, 4294901760
    %v721 = vsub.f32 %v547, %v720
    %v722 = vand.u32 %v721, 4294901760
    %v723 = vsub.f32 %v721, %v722
    %v724 = vand.u32 %v723, 4294901760
    %725 = vmatpush1.msra.mxu0 %v724
    %726 = vmatprep.subr.mxu0 0.0
    %v727 = vand.u32 %v548, 4294901760
    %v728 = vsub.f32 %v548, %v727
    %v729 = vand.u32 %v728, 4294901760
    %v730 = vsub.f32 %v728, %v729
    %v731 = vand.u32 %v730, 4294901760
    %732 = vmatpush1.msra.mxu0 %v731
    %733 = vmatprep.subr.mxu0 0.0
    %v734 = vand.u32 %v549, 4294901760
    %v735 = vsub.f32 %v549, %v734
    %v736 = vand.u32 %v735, 4294901760
    %v737 = vsub.f32 %v735, %v736
    %v738 = vand.u32 %v737, 4294901760
    %739 = vmatpush1.msra.mxu0 %v738
    %740 = vmatprep.subr.mxu0 0.0
    %v741 = vand.u32 %v550, 4294901760
    %v742 = vsub.f32 %v550, %v741
    %v743 = vand.u32 %v742, 4294901760
    %v744 = vsub.f32 %v742, %v743
    %v745 = vand.u32 %v744, 4294901760
    %746 = vmatpush1.msra.mxu0 %v745
    %747 = vmatprep.subr.mxu0 0.0
    %v748 = vand.u32 %v551, 4294901760
    %v749 = vsub.f32 %v551, %v748
    %v750 = vand.u32 %v749, 4294901760
    %v751 = vsub.f32 %v749, %v750
    %v752 = vand.u32 %v751, 4294901760
    %753 = vmatpush1.msra.mxu0 %v752
    %754 = vmatprep.subr.mxu0 0.0
    %v755 = vand.u32 %v552, 4294901760
    %v756 = vsub.f32 %v552, %v755
    %v757 = vand.u32 %v756, 4294901760
    %v758 = vsub.f32 %v756, %v757
    %v759 = vand.u32 %v758, 4294901760
    %760 = vmatpush1.msra.mxu0 %v759
    %761 = vmatprep.subr.mxu0 0.0
    %v762 = vand.u32 %v553, 4294901760
    %v763 = vsub.f32 %v553, %v762
    %v764 = vand.u32 %v763, 4294901760
    %v765 = vsub.f32 %v763, %v764
    %v766 = vand.u32 %v765, 4294901760
    %767 = vmatpush1.msra.mxu0 %v766
    %768 = vmatprep.subr.mxu0 0.0
    %v769 = vand.u32 %v554, 4294901760
    %v770 = vsub.f32 %v554, %v769
    %v771 = vand.u32 %v770, 4294901760
    %v772 = vsub.f32 %v770, %v771
    %v773 = vand.u32 %v772, 4294901760
    %774 = vmatpush1.msra.mxu0 %v773
    %775 = vmatprep.subr.mxu0 0.0
    %776 = vmatpush1.msra.mxu0 0.0
    %777 = vmatprep.subr.mxu0 0.0
    %778 = vmatpush1.msra.mxu0 0.0
    %779 = vmatprep.subr.mxu0 0.0
    %780 = vmatpush1.msra.mxu0 0.0
    %781 = vmatprep.subr.mxu0 0.0
    %782 = vmatpush1.msra.mxu0 0.0
    %783 = vmatprep.subr.mxu0 0.0
    %784 = vmatpush1.msra.mxu0 0.0
    %785 = vmatprep.subr.mxu0 0.0
    %786 = vmatpush1.msra.mxu0 0.0
    %787 = vmatprep.subr.mxu0 0.0
    %788 = vmatpush1.msra.mxu0 0.0
    %789 = vmatprep.subr.mxu0 0.0
    %790 = vmatpush1.msra.mxu0 0.0
    %791 = vmatprep.subr.mxu0 0.0
    %792 = vmatpush1.msra.mxu0 0.0
    %793 = vmatprep.subr.mxu0 0.0
    %794 = vmatpush1.msra.mxu0 0.0
    %795 = vmatprep.subr.mxu0 0.0
    %796 = vmatpush1.msra.mxu0 0.0
    %797 = vmatprep.subr.mxu0 0.0
    %798 = vmatpush1.msra.mxu0 0.0
    %799 = vmatprep.subr.mxu0 0.0
    %800 = vmatpush1.msra.mxu0 0.0
    %801 = vmatprep.subr.mxu0 0.0
    %802 = vmatpush1.msra.mxu0 0.0
    %803 = vmatprep.subr.mxu0 0.0
    %804 = vmatpush1.msra.mxu0 0.0
    %805 = vmatprep.subr.mxu0 0.0
    %806 = vmatpush1.msra.mxu0 0.0
    %807 = vmatprep.mubr.f32.mxu0 0.0
    %v808 = vand.u32 %v537, 4294901760
    %809 = vmatmul.mubr.f32.gmra.mrb[0].mxu0 %v808
    %v810 = vpop.f32.mrb[0].mxu0
    %v811 = vadd.f32 %v650, %v810
    %v812 = vpop.f32.mrb[0].mxu0
    %813 = vmatprep.mubr.f32.mxu0 0.0
    %v814 = vand.u32 %v538, 4294901760
    %815 = vmatmul.mubr.f32.gmra.mrb[0].mxu0 %v814
    %v816 = vpop.f32.mrb[0].mxu0
    %v817 = vadd.f32 %v660, %v816
    %v818 = vpop.f32.mrb[0].mxu0
    %819 = vdwg.mxu0
    %820 = vmatprep.subr.mxu0 0.0
    %v821 = vand.u32 %v539, 4294901760
    %v822 = vsub.f32 %v539, %v821
    %823 = vmatpush1.msra.mxu0 %v822
    %824 = vmatprep.subr.mxu0 0.0
    %v825 = vand.u32 %v540, 4294901760
    %v826 = vsub.f32 %v540, %v825
    %827 = vmatpush1.msra.mxu0 %v826
    %828 = vmatprep.subr.mxu0 0.0
    %v829 = vand.u32 %v541, 4294901760
    %v830 = vsub.f32 %v541, %v829
    %831 = vmatpush1.msra.mxu0 %v830
    %832 = vmatprep.subr.mxu0 0.0
    %v833 = vand.u32 %v542, 4294901760
    %v834 = vsub.f32 %v542, %v833
    %835 = vmatpush1.msra.mxu0 %v834
    %836 = vmatprep.subr.mxu0 0.0
    %v837 = vand.u32 %v543, 4294901760
    %v838 = vsub.f32 %v543, %v837
    %839 = vmatpush1.msra.mxu0 %v838
    %840 = vmatprep.subr.mxu0 0.0
    %v841 = vand.u32 %v544, 4294901760
    %v842 = vsub.f32 %v544, %v841
    %843 = vmatpush1.msra.mxu0 %v842
    %844 = vmatprep.subr.mxu0 0.0
    %v845 = vand.u32 %v545, 4294901760
    %v846 = vsub.f32 %v545, %v845
    %847 = vmatpush1.msra.mxu0 %v846
    %848 = vmatprep.subr.mxu0 0.0
    %v849 = vand.u32 %v546, 4294901760
    %v850 = vsub.f32 %v546, %v849
    %851 = vmatpush1.msra.mxu0 %v850
    %852 = vmatprep.subr.mxu0 0.0
    %v853 = vand.u32 %v547, 4294901760
    %v854 = vsub.f32 %v547, %v853
    %855 = vmatpush1.msra.mxu0 %v854
    %856 = vmatprep.subr.mxu0 0.0
    %v857 = vand.u32 %v548, 4294901760
    %v858 = vsub.f32 %v548, %v857
    %859 = vmatpush1.msra.mxu0 %v858
    %860 = vmatprep.subr.mxu0 0.0
    %v861 = vand.u32 %v549, 4294901760
    %v862 = vsub.f32 %v549, %v861
    %863 = vmatpush1.msra.mxu0 %v862
    %864 = vmatprep.subr.mxu0 0.0
    %v865 = vand.u32 %v550, 4294901760
    %v866 = vsub.f32 %v550, %v865
    %867 = vmatpush1.msra.mxu0 %v866
    %868 = vmatprep.subr.mxu0 0.0
    %v869 = vand.u32 %v551, 4294901760
    %v870 = vsub.f32 %v551, %v869
    %871 = vmatpush1.msra.mxu0 %v870
    %872 = vmatprep.subr.mxu0 0.0
    %v873 = vand.u32 %v552, 4294901760
    %v874 = vsub.f32 %v552, %v873
    %875 = vmatpush1.msra.mxu0 %v874
    %876 = vmatprep.subr.mxu0 0.0
    %v877 = vand.u32 %v553, 4294901760
    %v878 = vsub.f32 %v553, %v877
    %879 = vmatpush1.msra.mxu0 %v878
    %880 = vmatprep.subr.mxu0 0.0
    %v881 = vand.u32 %v554, 4294901760
    %v882 = vsub.f32 %v554, %v881
    %883 = vmatpush1.msra.mxu0 %v882
    %884 = vmatprep.subr.mxu0 0.0
    %885 = vmatpush1.msra.mxu0 0.0
    %886 = vmatprep.subr.mxu0 0.0
    %887 = vmatpush1.msra.mxu0 0.0
    %888 = vmatprep.subr.mxu0 0.0
    %889 = vmatpush1.msra.mxu0 0.0
    %890 = vmatprep.subr.mxu0 0.0
    %891 = vmatpush1.msra.mxu0 0.0
    %892 = vmatprep.subr.mxu0 0.0
    %893 = vmatpush1.msra.mxu0 0.0
    %894 = vmatprep.subr.mxu0 0.0
    %895 = vmatpush1.msra.mxu0 0.0
    %896 = vmatprep.subr.mxu0 0.0
    %897 = vmatpush1.msra.mxu0 0.0
    %898 = vmatprep.subr.mxu0 0.0
    %899 = vmatpush1.msra.mxu0 0.0
    %900 = vmatprep.subr.mxu0 0.0
    %901 = vmatpush1.msra.mxu0 0.0
    %902 = vmatprep.subr.mxu0 0.0
    %903 = vmatpush1.msra.mxu0 0.0
    %904 = vmatprep.subr.mxu0 0.0
    %905 = vmatpush1.msra.mxu0 0.0
    %906 = vmatprep.subr.mxu0 0.0
    %907 = vmatpush1.msra.mxu0 0.0
    %908 = vmatprep.subr.mxu0 0.0
    %909 = vmatpush1.msra.mxu0 0.0
    %910 = vmatprep.subr.mxu0 0.0
    %911 = vmatpush1.msra.mxu0 0.0
    %912 = vmatprep.subr.mxu0 0.0
    %913 = vmatpush1.msra.mxu0 0.0
    %914 = vmatprep.subr.mxu0 0.0
    %915 = vmatpush1.msra.mxu0 0.0
    %916 = vmatprep.mubr.f32.mxu0 0.0
    %v917 = vand.u32 %v537, 4294901760
    %v918 = vsub.f32 %v537, %v917
    %919 = vmatmul.mubr.f32.gmra.mrb[0].mxu0 %v918
    %v920 = vpop.f32.mrb[0].mxu0
    %v921 = vadd.f32 %v811, %v920
    %v922 = vpop.f32.mrb[0].mxu0
    %923 = vmatprep.mubr.f32.mxu0 0.0
    %v924 = vand.u32 %v538, 4294901760
    %v925 = vsub.f32 %v538, %v924
    %926 = vmatmul.mubr.f32.gmra.mrb[0].mxu0 %v925
    %v927 = vpop.f32.mrb[0].mxu0
    %v928 = vadd.f32 %v817, %v927
    %v929 = vpop.f32.mrb[0].mxu0
    %930 = vdwg.mxu0
    %931 = vmatprep.subr.mxu0 0.0
    %v932 = vand.u32 %v539, 4294901760
    %933 = vmatpush1.msra.mxu0 %v932
    %934 = vmatprep.subr.mxu0 0.0
    %v935 = vand.u32 %v540, 4294901760
    %936 = vmatpush1.msra.mxu0 %v935
    %937 = vmatprep.subr.mxu0 0.0
    %v938 = vand.u32 %v541, 4294901760
    %939 = vmatpush1.msra.mxu0 %v938
    %940 = vmatprep.subr.mxu0 0.0
    %v941 = vand.u32 %v542, 4294901760
    %942 = vmatpush1.msra.mxu0 %v941
    %943 = vmatprep.subr.mxu0 0.0
    %v944 = vand.u32 %v543, 4294901760
    %945 = vmatpush1.msra.mxu0 %v944
    %946 = vmatprep.subr.mxu0 0.0
    %v947 = vand.u32 %v544, 4294901760
    %948 = vmatpush1.msra.mxu0 %v947
    %949 = vmatprep.subr.mxu0 0.0
    %v950 = vand.u32 %v545, 4294901760
    %951 = vmatpush1.msra.mxu0 %v950
    %952 = vmatprep.subr.mxu0 0.0
    %v953 = vand.u32 %v546, 4294901760
    %954 = vmatpush1.msra.mxu0 %v953
    %955 = vmatprep.subr.mxu0 0.0
    %v956 = vand.u32 %v547, 4294901760
    %957 = vmatpush1.msra.mxu0 %v956
    %958 = vmatprep.subr.mxu0 0.0
    %v959 = vand.u32 %v548, 4294901760
    %960 = vmatpush1.msra.mxu0 %v959
    %961 = vmatprep.subr.mxu0 0.0
    %v962 = vand.u32 %v549, 4294901760
    %963 = vmatpush1.msra.mxu0 %v962
    %964 = vmatprep.subr.mxu0 0.0
    %v965 = vand.u32 %v550, 4294901760
    %966 = vmatpush1.msra.mxu0 %v965
    %967 = vmatprep.subr.mxu0 0.0
    %v968 = vand.u32 %v551, 4294901760
    %969 = vmatpush1.msra.mxu0 %v968
    %970 = vmatprep.subr.mxu0 0.0
    %v971 = vand.u32 %v552, 4294901760
    %972 = vmatpush1.msra.mxu0 %v971
    %973 = vmatprep.subr.mxu0 0.0
    %v974 = vand.u32 %v553, 4294901760
    %975 = vmatpush1.msra.mxu0 %v974
    %976 = vmatprep.subr.mxu0 0.0
    %v977 = vand.u32 %v554, 4294901760
    %978 = vmatpush1.msra.mxu0 %v977
    %979 = vmatprep.subr.mxu0 0.0
    %980 = vmatpush1.msra.mxu0 0.0
    %981 = vmatprep.subr.mxu0 0.0
    %982 = vmatpush1.msra.mxu0 0.0
    %983 = vmatprep.subr.mxu0 0.0
    %984 = vmatpush1.msra.mxu0 0.0
    %985 = vmatprep.subr.mxu0 0.0
    %986 = vmatpush1.msra.mxu0 0.0
    %987 = vmatprep.subr.mxu0 0.0
    %988 = vmatpush1.msra.mxu0 0.0
    %989 = vmatprep.subr.mxu0 0.0
    %990 = vmatpush1.msra.mxu0 0.0
    %991 = vmatprep.subr.mxu0 0.0
    %992 = vmatpush1.msra.mxu0 0.0
    %993 = vmatprep.subr.mxu0 0.0
    %994 = vmatpush1.msra.mxu0 0.0
    %995 = vmatprep.subr.mxu0 0.0
    %996 = vmatpush1.msra.mxu0 0.0
    %997 = vmatprep.subr.mxu0 0.0
    %998 = vmatpush1.msra.mxu0 0.0
    %999 = vmatprep.subr.mxu0 0.0
    %1000 = vmatpush1.msra.mxu0 0.0
    %1001 = vmatprep.subr.mxu0 0.0
    %1002 = vmatpush1.msra.mxu0 0.0
    %1003 = vmatprep.subr.mxu0 0.0
    %1004 = vmatpush1.msra.mxu0 0.0
    %1005 = vmatprep.subr.mxu0 0.0
    %1006 = vmatpush1.msra.mxu0 0.0
    %1007 = vmatprep.subr.mxu0 0.0
    %1008 = vmatpush1.msra.mxu0 0.0
    %1009 = vmatprep.subr.mxu0 0.0
    %1010 = vmatpush1.msra.mxu0 0.0
    %1011 = vmatprep.mubr.f32.mxu0 0.0
    %v1012 = vand.u32 %v537, 4294901760
    %v1013 = vsub.f32 %v537, %v1012
    %v1014 = vand.u32 %v1013, 4294901760
    %1015 = vmatmul.mubr.f32.gmra.mrb[0].mxu0 %v1014
    %v1016 = vpop.f32.mrb[0].mxu0
    %v1017 = vadd.f32 %v921, %v1016
    %v1018 = vpop.f32.mrb[0].mxu0
    %1019 = vmatprep.mubr.f32.mxu0 0.0
    %v1020 = vand.u32 %v538, 4294901760
    %v1021 = vsub.f32 %v538, %v1020
    %v1022 = vand.u32 %v1021, 4294901760
    %1023 = vmatmul.mubr.f32.gmra.mrb[0].mxu0 %v1022
    %v1024 = vpop.f32.mrb[0].mxu0
    %v1025 = vadd.f32 %v928, %v1024
    %v1026 = vpop.f32.mrb[0].mxu0
    %1027 = vdwg.mxu0
    %1028 = vmatprep.subr.mxu0 0.0
    %v1029 = vand.u32 %v539, 4294901760
    %v1030 = vsub.f32 %v539, %v1029
    %v1031 = vand.u32 %v1030, 4294901760
    %1032 = vmatpush1.msra.mxu0 %v1031
    %1033 = vmatprep.subr.mxu0 0.0
    %v1034 = vand.u32 %v540, 4294901760
    %v1035 = vsub.f32 %v540, %v1034
    %v1036 = vand.u32 %v1035, 4294901760
    %1037 = vmatpush1.msra.mxu0 %v1036
    %1038 = vmatprep.subr.mxu0 0.0
    %v1039 = vand.u32 %v541, 4294901760
    %v1040 = vsub.f32 %v541, %v1039
    %v1041 = vand.u32 %v1040, 4294901760
    %1042 = vmatpush1.msra.mxu0 %v1041
    %1043 = vmatprep.subr.mxu0 0.0
    %v1044 = vand.u32 %v542, 4294901760
    %v1045 = vsub.f32 %v542, %v1044
    %v1046 = vand.u32 %v1045, 4294901760
    %1047 = vmatpush1.msra.mxu0 %v1046
    %1048 = vmatprep.subr.mxu0 0.0
    %v1049 = vand.u32 %v543, 4294901760
    %v1050 = vsub.f32 %v543, %v1049
    %v1051 = vand.u32 %v1050, 4294901760
    %1052 = vmatpush1.msra.mxu0 %v1051
    %1053 = vmatprep.subr.mxu0 0.0
    %v1054 = vand.u32 %v544, 4294901760
    %v1055 = vsub.f32 %v544, %v1054
    %v1056 = vand.u32 %v1055, 4294901760
    %1057 = vmatpush1.msra.mxu0 %v1056
    %1058 = vmatprep.subr.mxu0 0.0
    %v1059 = vand.u32 %v545, 4294901760
    %v1060 = vsub.f32 %v545, %v1059
    %v1061 = vand.u32 %v1060, 4294901760
    %1062 = vmatpush1.msra.mxu0 %v1061
    %1063 = vmatprep.subr.mxu0 0.0
    %v1064 = vand.u32 %v546, 4294901760
    %v1065 = vsub.f32 %v546, %v1064
    %v1066 = vand.u32 %v1065, 4294901760
    %1067 = vmatpush1.msra.mxu0 %v1066
    %1068 = vmatprep.subr.mxu0 0.0
    %v1069 = vand.u32 %v547, 4294901760
    %v1070 = vsub.f32 %v547, %v1069
    %v1071 = vand.u32 %v1070, 4294901760
    %1072 = vmatpush1.msra.mxu0 %v1071
    %1073 = vmatprep.subr.mxu0 0.0
    %v1074 = vand.u32 %v548, 4294901760
    %v1075 = vsub.f32 %v548, %v1074
    %v1076 = vand.u32 %v1075, 4294901760
    %1077 = vmatpush1.msra.mxu0 %v1076
    %1078 = vmatprep.subr.mxu0 0.0
    %v1079 = vand.u32 %v549, 4294901760
    %v1080 = vsub.f32 %v549, %v1079
    %v1081 = vand.u32 %v1080, 4294901760
    %1082 = vmatpush1.msra.mxu0 %v1081
    %1083 = vmatprep.subr.mxu0 0.0
    %v1084 = vand.u32 %v550, 4294901760
    %v1085 = vsub.f32 %v550, %v1084
    %v1086 = vand.u32 %v1085, 4294901760
    %1087 = vmatpush1.msra.mxu0 %v1086
    %1088 = vmatprep.subr.mxu0 0.0
    %v1089 = vand.u32 %v551, 4294901760
    %v1090 = vsub.f32 %v551, %v1089
    %v1091 = vand.u32 %v1090, 4294901760
    %1092 = vmatpush1.msra.mxu0 %v1091
    %1093 = vmatprep.subr.mxu0 0.0
    %v1094 = vand.u32 %v552, 4294901760
    %v1095 = vsub.f32 %v552, %v1094
    %v1096 = vand.u32 %v1095, 4294901760
    %1097 = vmatpush1.msra.mxu0 %v1096
    %1098 = vmatprep.subr.mxu0 0.0
    %v1099 = vand.u32 %v553, 4294901760
    %v1100 = vsub.f32 %v553, %v1099
    %v1101 = vand.u32 %v1100, 4294901760
    %1102 = vmatpush1.msra.mxu0 %v1101
    %1103 = vmatprep.subr.mxu0 0.0
    %v1104 = vand.u32 %v554, 4294901760
    %v1105 = vsub.f32 %v554, %v1104
    %v1106 = vand.u32 %v1105, 4294901760
    %1107 = vmatpush1.msra.mxu0 %v1106
    %1108 = vmatprep.subr.mxu0 0.0
    %1109 = vmatpush1.msra.mxu0 0.0
    %1110 = vmatprep.subr.mxu0 0.0
    %1111 = vmatpush1.msra.mxu0 0.0
    %1112 = vmatprep.subr.mxu0 0.0
    %1113 = vmatpush1.msra.mxu0 0.0
    %1114 = vmatprep.subr.mxu0 0.0
    %1115 = vmatpush1.msra.mxu0 0.0
    %1116 = vmatprep.subr.mxu0 0.0
    %1117 = vmatpush1.msra.mxu0 0.0
    %1118 = vmatprep.subr.mxu0 0.0
    %1119 = vmatpush1.msra.mxu0 0.0
    %1120 = vmatprep.subr.mxu0 0.0
    %1121 = vmatpush1.msra.mxu0 0.0
    %1122 = vmatprep.subr.mxu0 0.0
    %1123 = vmatpush1.msra.mxu0 0.0
    %1124 = vmatprep.subr.mxu0 0.0
    %1125 = vmatpush1.msra.mxu0 0.0
    %1126 = vmatprep.subr.mxu0 0.0
    %1127 = vmatpush1.msra.mxu0 0.0
    %1128 = vmatprep.subr.mxu0 0.0
    %1129 = vmatpush1.msra.mxu0 0.0
    %1130 = vmatprep.subr.mxu0 0.0
    %1131 = vmatpush1.msra.mxu0 0.0
    %1132 = vmatprep.subr.mxu0 0.0
    %1133 = vmatpush1.msra.mxu0 0.0
    %1134 = vmatprep.subr.mxu0 0.0
    %1135 = vmatpush1.msra.mxu0 0.0
    %1136 = vmatprep.subr.mxu0 0.0
    %1137 = vmatpush1.msra.mxu0 0.0
    %1138 = vmatprep.subr.mxu0 0.0
    %1139 = vmatpush1.msra.mxu0 0.0
    %1140 = vmatprep.mubr.f32.mxu0 0.0
    %v1141 = vand.u32 %v537, 4294901760
    %1142 = vmatmul.mubr.f32.gmra.mrb[0].mxu0 %v1141
    %v1143 = vpop.f32.mrb[0].mxu0
    %v1144 = vadd.f32 %v1017, %v1143
    %v1145 = vpop.f32.mrb[0].mxu0
    %1146 = vmatprep.mubr.f32.mxu0 0.0
    %v1147 = vand.u32 %v538, 4294901760
    %1148 = vmatmul.mubr.f32.gmra.mrb[0].mxu0 %v1147
    %v1149 = vpop.f32.mrb[0].mxu0
    %v1150 = vadd.f32 %v1025, %v1149
    %v1151 = vpop.f32.mrb[0].mxu0
    %1152 = vdwg.mxu0
    %1153 = vmatprep.subr.mxu0 0.0
    %v1154 = vand.u32 %v539, 4294901760
    %1155 = vmatpush1.msra.mxu0 %v1154
    %1156 = vmatprep.subr.mxu0 0.0
    %v1157 = vand.u32 %v540, 4294901760
    %1158 = vmatpush1.msra.mxu0 %v1157
    %1159 = vmatprep.subr.mxu0 0.0
    %v1160 = vand.u32 %v541, 4294901760
    %1161 = vmatpush1.msra.mxu0 %v1160
    %1162 = vmatprep.subr.mxu0 0.0
    %v1163 = vand.u32 %v542, 4294901760
    %1164 = vmatpush1.msra.mxu0 %v1163
    %1165 = vmatprep.subr.mxu0 0.0
    %v1166 = vand.u32 %v543, 4294901760
    %1167 = vmatpush1.msra.mxu0 %v1166
    %1168 = vmatprep.subr.mxu0 0.0
    %v1169 = vand.u32 %v544, 4294901760
    %1170 = vmatpush1.msra.mxu0 %v1169
    %1171 = vmatprep.subr.mxu0 0.0
    %v1172 = vand.u32 %v545, 4294901760
    %1173 = vmatpush1.msra.mxu0 %v1172
    %1174 = vmatprep.subr.mxu0 0.0
    %v1175 = vand.u32 %v546, 4294901760
    %1176 = vmatpush1.msra.mxu0 %v1175
    %1177 = vmatprep.subr.mxu0 0.0
    %v1178 = vand.u32 %v547, 4294901760
    %1179 = vmatpush1.msra.mxu0 %v1178
    %1180 = vmatprep.subr.mxu0 0.0
    %v1181 = vand.u32 %v548, 4294901760
    %1182 = vmatpush1.msra.mxu0 %v1181
    %1183 = vmatprep.subr.mxu0 0.0
    %v1184 = vand.u32 %v549, 4294901760
    %1185 = vmatpush1.msra.mxu0 %v1184
    %1186 = vmatprep.subr.mxu0 0.0
    %v1187 = vand.u32 %v550, 4294901760
    %1188 = vmatpush1.msra.mxu0 %v1187
    %1189 = vmatprep.subr.mxu0 0.0
    %v1190 = vand.u32 %v551, 4294901760
    %1191 = vmatpush1.msra.mxu0 %v1190
    %1192 = vmatprep.subr.mxu0 0.0
    %v1193 = vand.u32 %v552, 4294901760
    %1194 = vmatpush1.msra.mxu0 %v1193
    %1195 = vmatprep.subr.mxu0 0.0
    %v1196 = vand.u32 %v553, 4294901760
    %1197 = vmatpush1.msra.mxu0 %v1196
    %1198 = vmatprep.subr.mxu0 0.0
    %v1199 = vand.u32 %v554, 4294901760
    %1200 = vmatpush1.msra.mxu0 %v1199
    %1201 = vmatprep.subr.mxu0 0.0
    %1202 = vmatpush1.msra.mxu0 0.0
    %1203 = vmatprep.subr.mxu0 0.0
    %1204 = vmatpush1.msra.mxu0 0.0
    %1205 = vmatprep.subr.mxu0 0.0
    %1206 = vmatpush1.msra.mxu0 0.0
    %1207 = vmatprep.subr.mxu0 0.0
    %1208 = vmatpush1.msra.mxu0 0.0
    %1209 = vmatprep.subr.mxu0 0.0
    %1210 = vmatpush1.msra.mxu0 0.0
    %1211 = vmatprep.subr.mxu0 0.0
    %1212 = vmatpush1.msra.mxu0 0.0
    %1213 = vmatprep.subr.mxu0 0.0
    %1214 = vmatpush1.msra.mxu0 0.0
    %1215 = vmatprep.subr.mxu0 0.0
    %1216 = vmatpush1.msra.mxu0 0.0
    %1217 = vmatprep.subr.mxu0 0.0
    %1218 = vmatpush1.msra.mxu0 0.0
    %1219 = vmatprep.subr.mxu0 0.0
    %1220 = vmatpush1.msra.mxu0 0.0
    %1221 = vmatprep.subr.mxu0 0.0
    %1222 = vmatpush1.msra.mxu0 0.0
    %1223 = vmatprep.subr.mxu0 0.0
    %1224 = vmatpush1.msra.mxu0 0.0
    %1225 = vmatprep.subr.mxu0 0.0
    %1226 = vmatpush1.msra.mxu0 0.0
    %1227 = vmatprep.subr.mxu0 0.0
    %1228 = vmatpush1.msra.mxu0 0.0
    %1229 = vmatprep.subr.mxu0 0.0
    %1230 = vmatpush1.msra.mxu0 0.0
    %1231 = vmatprep.subr.mxu0 0.0
    %1232 = vmatpush1.msra.mxu0 0.0
    %1233 = vmatprep.mubr.f32.mxu0 0.0
    %v1234 = vand.u32 %v537, 4294901760
    %1235 = vmatmul.mubr.f32.gmra.mrb[0].mxu0 %v1234
    %v1236 = vpop.f32.mrb[0].mxu0
    %v1237 = vadd.f32 %v1144, %v1236
    %v1238 = vpop.f32.mrb[0].mxu0
    %1239 = vmatprep.mubr.f32.mxu0 0.0
    %v1240 = vand.u32 %v538, 4294901760
    %1241 = vmatmul.mubr.f32.gmra.mrb[0].mxu0 %v1240
    %v1242 = vpop.f32.mrb[0].mxu0
    %v1243 = vadd.f32 %v1150, %v1242
    %v1244 = vpop.f32.mrb[0].mxu0
    %1245 = vdwg.mxu0
    %v1246 = vtanh.pop %v1237
    %v1247 = vtanh.pop %v1243
    %v1248 = vld [vmem:[%s5] sm:$0xff]
    %v1249 = vld [vmem:[%s5 + $0x8] sm:$0xff]
    %v1250 = vld [vmem:[%s5 + $0x10] sm:$0xff]
    %v1251 = vld [vmem:[%s5 + $0x18] sm:$0xff]
    %v1252 = vld [vmem:[%s5 + $0x20] sm:$0xff]
    %v1253 = vld [vmem:[%s5 + $0x28] sm:$0xff]
    %v1254 = vld [vmem:[%s5 + $0x30] sm:$0xff]
    %v1255 = vld [vmem:[%s5 + $0x38] sm:$0xff]
    %v1256 = vld [vmem:[%s5 + $0x40] sm:$0xff]
    %v1257 = vld [vmem:[%s5 + $0x48] sm:$0xff]
    %v1258 = vld [vmem:[%s5 + $0x50] sm:$0xff]
    %v1259 = vld [vmem:[%s5 + $0x58] sm:$0xff]
    %v1260 = vld [vmem:[%s5 + $0x60] sm:$0xff]
    %v1261 = vld [vmem:[%s5 + $0x68] sm:$0xff]
    %v1262 = vld [vmem:[%s5 + $0x70] sm:$0xff]
    %v1263 = vld [vmem:[%s5 + $0x78] sm:$0xff]
    %v1264 = vld [vmem:[%s6] sm:$0x1]
    %v1266 = vlaneseq
    %v1267 = vshrl.u32 %v1266, 7
    %v1268 = vsub.s32 0, %v1267
    %v1269 = vrot.slane %v1264, %v1268
    %1271 = vmatprep.subr.mxu0 0.0
    %v1272 = vand.u32 %v1248, 4294901760
    %1273 = vmatpush1.msra.mxu0 %v1272
    %1274 = vmatprep.subr.mxu0 0.0
    %v1275 = vand.u32 %v1249, 4294901760
    %1276 = vmatpush1.msra.mxu0 %v1275
    %1277 = vmatprep.subr.mxu0 0.0
    %v1278 = vand.u32 %v1250, 4294901760
    %1279 = vmatpush1.msra.mxu0 %v1278
    %1280 = vmatprep.subr.mxu0 0.0
    %v1281 = vand.u32 %v1251, 4294901760
    %1282 = vmatpush1.msra.mxu0 %v1281
    %1283 = vmatprep.subr.mxu0 0.0
    %v1284 = vand.u32 %v1252, 4294901760
    %1285 = vmatpush1.msra.mxu0 %v1284
    %1286 = vmatprep.subr.mxu0 0.0
    %v1287 = vand.u32 %v1253, 4294901760
    %1288 = vmatpush1.msra.mxu0 %v1287
    %1289 = vmatprep.subr.mxu0 0.0
    %v1290 = vand.u32 %v1254, 4294901760
    %1291 = vmatpush1.msra.mxu0 %v1290
    %1292 = vmatprep.subr.mxu0 0.0
    %v1293 = vand.u32 %v1255, 4294901760
    %1294 = vmatpush1.msra.mxu0 %v1293
    %1295 = vmatprep.subr.mxu0 0.0
    %v1296 = vand.u32 %v1256, 4294901760
    %1297 = vmatpush1.msra.mxu0 %v1296
    %1298 = vmatprep.subr.mxu0 0.0
    %v1299 = vand.u32 %v1257, 4294901760
    %1300 = vmatpush1.msra.mxu0 %v1299
    %1301 = vmatprep.subr.mxu0 0.0
    %v1302 = vand.u32 %v1258, 4294901760
    %1303 = vmatpush1.msra.mxu0 %v1302
    %1304 = vmatprep.subr.mxu0 0.0
    %v1305 = vand.u32 %v1259, 4294901760
    %1306 = vmatpush1.msra.mxu0 %v1305
    %1307 = vmatprep.subr.mxu0 0.0
    %v1308 = vand.u32 %v1260, 4294901760
    %1309 = vmatpush1.msra.mxu0 %v1308
    %1310 = vmatprep.subr.mxu0 0.0
    %v1311 = vand.u32 %v1261, 4294901760
    %1312 = vmatpush1.msra.mxu0 %v1311
    %1313 = vmatprep.subr.mxu0 0.0
    %v1314 = vand.u32 %v1262, 4294901760
    %1315 = vmatpush1.msra.mxu0 %v1314
    %1316 = vmatprep.subr.mxu0 0.0
    %v1317 = vand.u32 %v1263, 4294901760
    %1318 = vmatpush1.msra.mxu0 %v1317
    %1319 = vmatprep.subr.mxu0 0.0
    %1320 = vmatpush1.msra.mxu0 0.0
    %1321 = vmatprep.subr.mxu0 0.0
    %1322 = vmatpush1.msra.mxu0 0.0
    %1323 = vmatprep.subr.mxu0 0.0
    %1324 = vmatpush1.msra.mxu0 0.0
    %1325 = vmatprep.subr.mxu0 0.0
    %1326 = vmatpush1.msra.mxu0 0.0
    %1327 = vmatprep.subr.mxu0 0.0
    %1328 = vmatpush1.msra.mxu0 0.0
    %1329 = vmatprep.subr.mxu0 0.0
    %1330 = vmatpush1.msra.mxu0 0.0
    %1331 = vmatprep.subr.mxu0 0.0
    %1332 = vmatpush1.msra.mxu0 0.0
    %1333 = vmatprep.subr.mxu0 0.0
    %1334 = vmatpush1.msra.mxu0 0.0
    %1335 = vmatprep.subr.mxu0 0.0
    %1336 = vmatpush1.msra.mxu0 0.0
    %1337 = vmatprep.subr.mxu0 0.0
    %1338 = vmatpush1.msra.mxu0 0.0
    %1339 = vmatprep.subr.mxu0 0.0
    %1340 = vmatpush1.msra.mxu0 0.0
    %1341 = vmatprep.subr.mxu0 0.0
    %1342 = vmatpush1.msra.mxu0 0.0
    %1343 = vmatprep.subr.mxu0 0.0
    %1344 = vmatpush1.msra.mxu0 0.0
    %1345 = vmatprep.subr.mxu0 0.0
    %1346 = vmatpush1.msra.mxu0 0.0
    %1347 = vmatprep.subr.mxu0 0.0
    %1348 = vmatpush1.msra.mxu0 0.0
    %1349 = vmatprep.subr.mxu0 0.0
    %1350 = vmatpush1.msra.mxu0 0.0
    %1351 = vmatprep.mubr.f32.mxu0 0.0
    %v1352 = vand.u32 %v1246, 4294901760
    %v1353 = vsub.f32 %v1246, %v1352
    %v1354 = vand.u32 %v1353, 4294901760
    %v1355 = vsub.f32 %v1353, %v1354
    %v1356 = vand.u32 %v1355, 4294901760
    %1357 = vmatmul.mubr.f32.gmra.mrb[0].mxu0 %v1356
    %v1358 = vpop.f32.mrb[0].mxu0
    %v1359 = vadd.f32 %v1269, %v1358
    %v1360 = vpop.f32.mrb[0].mxu0
    %1361 = vmatprep.mubr.f32.mxu0 0.0
    %v1362 = vand.u32 %v1247, 4294901760
    %v1363 = vsub.f32 %v1247, %v1362
    %v1364 = vand.u32 %v1363, 4294901760
    %v1365 = vsub.f32 %v1363, %v1364
    %v1366 = vand.u32 %v1365, 4294901760
    %1367 = vmatmul.mubr.f32.gmra.mrb[0].mxu0 %v1366
    %v1368 = vpop.f32.mrb[0].mxu0
    %v1369 = vadd.f32 %v1269, %v1368
    %v1370 = vpop.f32.mrb[0].mxu0
    %1371 = vdwg.mxu0
    %1372 = vmatprep.subr.mxu0 0.0
    %v1373 = vand.u32 %v1248, 4294901760
    %v1374 = vsub.f32 %v1248, %v1373
    %v1375 = vand.u32 %v1374, 4294901760
    %v1376 = vsub.f32 %v1374, %v1375
    %v1377 = vand.u32 %v1376, 4294901760
    %1378 = vmatpush1.msra.mxu0 %v1377
    %1379 = vmatprep.subr.mxu0 0.0
    %v1380 = vand.u32 %v1249, 4294901760
    %v1381 = vsub.f32 %v1249, %v1380
    %v1382 = vand.u32 %v1381, 4294901760
    %v1383 = vsub.f32 %v1381, %v1382
    %v1384 = vand.u32 %v1383, 4294901760
    %1385 = vmatpush1.msra.mxu0 %v1384
    %1386 = vmatprep.subr.mxu0 0.0
    %v1387 = vand.u32 %v1250, 4294901760
    %v1388 = vsub.f32 %v1250, %v1387
    %v1389 = vand.u32 %v1388, 4294901760
    %v1390 = vsub.f32 %v1388, %v1389
    %v1391 = vand.u32 %v1390, 4294901760
    %1392 = vmatpush1.msra.mxu0 %v1391
    %1393 = vmatprep.subr.mxu0 0.0
    %v1394 = vand.u32 %v1251, 4294901760
    %v1395 = vsub.f32 %v1251, %v1394
    %v1396 = vand.u32 %v1395, 4294901760
    %v1397 = vsub.f32 %v1395, %v1396
    %v1398 = vand.u32 %v1397, 4294901760
    %1399 = vmatpush1.msra.mxu0 %v1398
    %1400 = vmatprep.subr.mxu0 0.0
    %v1401 = vand.u32 %v1252, 4294901760
    %v1402 = vsub.f32 %v1252, %v1401
    %v1403 = vand.u32 %v1402, 4294901760
    %v1404 = vsub.f32 %v1402, %v1403
    %v1405 = vand.u32 %v1404, 4294901760
    %1406 = vmatpush1.msra.mxu0 %v1405
    %1407 = vmatprep.subr.mxu0 0.0
    %v1408 = vand.u32 %v1253, 4294901760
    %v1409 = vsub.f32 %v1253, %v1408
    %v1410 = vand.u32 %v1409, 4294901760
    %v1411 = vsub.f32 %v1409, %v1410
    %v1412 = vand.u32 %v1411, 4294901760
    %1413 = vmatpush1.msra.mxu0 %v1412
    %1414 = vmatprep.subr.mxu0 0.0
    %v1415 = vand.u32 %v1254, 4294901760
    %v1416 = vsub.f32 %v1254, %v1415
    %v1417 = vand.u32 %v1416, 4294901760
    %v1418 = vsub.f32 %v1416, %v1417
    %v1419 = vand.u32 %v1418, 4294901760
    %1420 = vmatpush1.msra.mxu0 %v1419
    %1421 = vmatprep.subr.mxu0 0.0
    %v1422 = vand.u32 %v1255, 4294901760
    %v1423 = vsub.f32 %v1255, %v1422
    %v1424 = vand.u32 %v1423, 4294901760
    %v1425 = vsub.f32 %v1423, %v1424
    %v1426 = vand.u32 %v1425, 4294901760
    %1427 = vmatpush1.msra.mxu0 %v1426
    %1428 = vmatprep.subr.mxu0 0.0
    %v1429 = vand.u32 %v1256, 4294901760
    %v1430 = vsub.f32 %v1256, %v1429
    %v1431 = vand.u32 %v1430, 4294901760
    %v1432 = vsub.f32 %v1430, %v1431
    %v1433 = vand.u32 %v1432, 4294901760
    %1434 = vmatpush1.msra.mxu0 %v1433
    %1435 = vmatprep.subr.mxu0 0.0
    %v1436 = vand.u32 %v1257, 4294901760
    %v1437 = vsub.f32 %v1257, %v1436
    %v1438 = vand.u32 %v1437, 4294901760
    %v1439 = vsub.f32 %v1437, %v1438
    %v1440 = vand.u32 %v1439, 4294901760
    %1441 = vmatpush1.msra.mxu0 %v1440
    %1442 = vmatprep.subr.mxu0 0.0
    %v1443 = vand.u32 %v1258, 4294901760
    %v1444 = vsub.f32 %v1258, %v1443
    %v1445 = vand.u32 %v1444, 4294901760
    %v1446 = vsub.f32 %v1444, %v1445
    %v1447 = vand.u32 %v1446, 4294901760
    %1448 = vmatpush1.msra.mxu0 %v1447
    %1449 = vmatprep.subr.mxu0 0.0
    %v1450 = vand.u32 %v1259, 4294901760
    %v1451 = vsub.f32 %v1259, %v1450
    %v1452 = vand.u32 %v1451, 4294901760
    %v1453 = vsub.f32 %v1451, %v1452
    %v1454 = vand.u32 %v1453, 4294901760
    %1455 = vmatpush1.msra.mxu0 %v1454
    %1456 = vmatprep.subr.mxu0 0.0
    %v1457 = vand.u32 %v1260, 4294901760
    %v1458 = vsub.f32 %v1260, %v1457
    %v1459 = vand.u32 %v1458, 4294901760
    %v1460 = vsub.f32 %v1458, %v1459
    %v1461 = vand.u32 %v1460, 4294901760
    %1462 = vmatpush1.msra.mxu0 %v1461
    %1463 = vmatprep.subr.mxu0 0.0
    %v1464 = vand.u32 %v1261, 4294901760
    %v1465 = vsub.f32 %v1261, %v1464
    %v1466 = vand.u32 %v1465, 4294901760
    %v1467 = vsub.f32 %v1465, %v1466
    %v1468 = vand.u32 %v1467, 4294901760
    %1469 = vmatpush1.msra.mxu0 %v1468
    %1470 = vmatprep.subr.mxu0 0.0
    %v1471 = vand.u32 %v1262, 4294901760
    %v1472 = vsub.f32 %v1262, %v1471
    %v1473 = vand.u32 %v1472, 4294901760
    %v1474 = vsub.f32 %v1472, %v1473
    %v1475 = vand.u32 %v1474, 4294901760
    %1476 = vmatpush1.msra.mxu0 %v1475
    %1477 = vmatprep.subr.mxu0 0.0
    %v1478 = vand.u32 %v1263, 4294901760
    %v1479 = vsub.f32 %v1263, %v1478
    %v1480 = vand.u32 %v1479, 4294901760
    %v1481 = vsub.f32 %v1479, %v1480
    %v1482 = vand.u32 %v1481, 4294901760
    %1483 = vmatpush1.msra.mxu0 %v1482
    %1484 = vmatprep.subr.mxu0 0.0
    %1485 = vmatpush1.msra.mxu0 0.0
    %1486 = vmatprep.subr.mxu0 0.0
    %1487 = vmatpush1.msra.mxu0 0.0
    %1488 = vmatprep.subr.mxu0 0.0
    %1489 = vmatpush1.msra.mxu0 0.0
    %1490 = vmatprep.subr.mxu0 0.0
    %1491 = vmatpush1.msra.mxu0 0.0
    %1492 = vmatprep.subr.mxu0 0.0
    %1493 = vmatpush1.msra.mxu0 0.0
    %1494 = vmatprep.subr.mxu0 0.0
    %1495 = vmatpush1.msra.mxu0 0.0
    %1496 = vmatprep.subr.mxu0 0.0
    %1497 = vmatpush1.msra.mxu0 0.0
    %1498 = vmatprep.subr.mxu0 0.0
    %1499 = vmatpush1.msra.mxu0 0.0
    %1500 = vmatprep.subr.mxu0 0.0
    %1501 = vmatpush1.msra.mxu0 0.0
    %1502 = vmatprep.subr.mxu0 0.0
    %1503 = vmatpush1.msra.mxu0 0.0
    %1504 = vmatprep.subr.mxu0 0.0
    %1505 = vmatpush1.msra.mxu0 0.0
    %1506 = vmatprep.subr.mxu0 0.0
    %1507 = vmatpush1.msra.mxu0 0.0
    %1508 = vmatprep.subr.mxu0 0.0
    %1509 = vmatpush1.msra.mxu0 0.0
    %1510 = vmatprep.subr.mxu0 0.0
    %1511 = vmatpush1.msra.mxu0 0.0
    %1512 = vmatprep.subr.mxu0 0.0
    %1513 = vmatpush1.msra.mxu0 0.0
    %1514 = vmatprep.subr.mxu0 0.0
    %1515 = vmatpush1.msra.mxu0 0.0
    %1516 = vmatprep.mubr.f32.mxu0 0.0
    %v1517 = vand.u32 %v1246, 4294901760
    %1518 = vmatmul.mubr.f32.gmra.mrb[0].mxu0 %v1517
    %v1519 = vpop.f32.mrb[0].mxu0
    %v1520 = vadd.f32 %v1359, %v1519
    %v1521 = vpop.f32.mrb[0].mxu0
    %1522 = vmatprep.mubr.f32.mxu0 0.0
    %v1523 = vand.u32 %v1247, 4294901760
    %1524 = vmatmul.mubr.f32.gmra.mrb[0].mxu0 %v1523
    %v1525 = vpop.f32.mrb[0].mxu0
    %v1526 = vadd.f32 %v1369, %v1525
    %v1527 = vpop.f32.mrb[0].mxu0
    %1528 = vdwg.mxu0
    %1529 = vmatprep.subr.mxu0 0.0
    %v1530 = vand.u32 %v1248, 4294901760
    %v1531 = vsub.f32 %v1248, %v1530
    %1532 = vmatpush1.msra.mxu0 %v1531
    %1533 = vmatprep.subr.mxu0 0.0
    %v1534 = vand.u32 %v1249, 4294901760
    %v1535 = vsub.f32 %v1249, %v1534
    %1536 = vmatpush1.msra.mxu0 %v1535
    %1537 = vmatprep.subr.mxu0 0.0
    %v1538 = vand.u32 %v1250, 4294901760
    %v1539 = vsub.f32 %v1250, %v1538
    %1540 = vmatpush1.msra.mxu0 %v1539
    %1541 = vmatprep.subr.mxu0 0.0
    %v1542 = vand.u32 %v1251, 4294901760
    %v1543 = vsub.f32 %v1251, %v1542
    %1544 = vmatpush1.msra.mxu0 %v1543
    %1545 = vmatprep.subr.mxu0 0.0
    %v1546 = vand.u32 %v1252, 4294901760
    %v1547 = vsub.f32 %v1252, %v1546
    %1548 = vmatpush1.msra.mxu0 %v1547
    %1549 = vmatprep.subr.mxu0 0.0
    %v1550 = vand.u32 %v1253, 4294901760
    %v1551 = vsub.f32 %v1253, %v1550
    %1552 = vmatpush1.msra.mxu0 %v1551
    %1553 = vmatprep.subr.mxu0 0.0
    %v1554 = vand.u32 %v1254, 4294901760
    %v1555 = vsub.f32 %v1254, %v1554
    %1556 = vmatpush1.msra.mxu0 %v1555
    %1557 = vmatprep.subr.mxu0 0.0
    %v1558 = vand.u32 %v1255, 4294901760
    %v1559 = vsub.f32 %v1255, %v1558
    %1560 = vmatpush1.msra.mxu0 %v1559
    %1561 = vmatprep.subr.mxu0 0.0
    %v1562 = vand.u32 %v1256, 4294901760
    %v1563 = vsub.f32 %v1256, %v1562
    %1564 = vmatpush1.msra.mxu0 %v1563
    %1565 = vmatprep.subr.mxu0 0.0
    %v1566 = vand.u32 %v1257, 4294901760
    %v1567 = vsub.f32 %v1257, %v1566
    %1568 = vmatpush1.msra.mxu0 %v1567
    %1569 = vmatprep.subr.mxu0 0.0
    %v1570 = vand.u32 %v1258, 4294901760
    %v1571 = vsub.f32 %v1258, %v1570
    %1572 = vmatpush1.msra.mxu0 %v1571
    %1573 = vmatprep.subr.mxu0 0.0
    %v1574 = vand.u32 %v1259, 4294901760
    %v1575 = vsub.f32 %v1259, %v1574
    %1576 = vmatpush1.msra.mxu0 %v1575
    %1577 = vmatprep.subr.mxu0 0.0
    %v1578 = vand.u32 %v1260, 4294901760
    %v1579 = vsub.f32 %v1260, %v1578
    %1580 = vmatpush1.msra.mxu0 %v1579
    %1581 = vmatprep.subr.mxu0 0.0
    %v1582 = vand.u32 %v1261, 4294901760
    %v1583 = vsub.f32 %v1261, %v1582
    %1584 = vmatpush1.msra.mxu0 %v1583
    %1585 = vmatprep.subr.mxu0 0.0
    %v1586 = vand.u32 %v1262, 4294901760
    %v1587 = vsub.f32 %v1262, %v1586
    %1588 = vmatpush1.msra.mxu0 %v1587
    %1589 = vmatprep.subr.mxu0 0.0
    %v1590 = vand.u32 %v1263, 4294901760
    %v1591 = vsub.f32 %v1263, %v1590
    %1592 = vmatpush1.msra.mxu0 %v1591
    %1593 = vmatprep.subr.mxu0 0.0
    %1594 = vmatpush1.msra.mxu0 0.0
    %1595 = vmatprep.subr.mxu0 0.0
    %1596 = vmatpush1.msra.mxu0 0.0
    %1597 = vmatprep.subr.mxu0 0.0
    %1598 = vmatpush1.msra.mxu0 0.0
    %1599 = vmatprep.subr.mxu0 0.0
    %1600 = vmatpush1.msra.mxu0 0.0
    %1601 = vmatprep.subr.mxu0 0.0
    %1602 = vmatpush1.msra.mxu0 0.0
    %1603 = vmatprep.subr.mxu0 0.0
    %1604 = vmatpush1.msra.mxu0 0.0
    %1605 = vmatprep.subr.mxu0 0.0
    %1606 = vmatpush1.msra.mxu0 0.0
    %1607 = vmatprep.subr.mxu0 0.0
    %1608 = vmatpush1.msra.mxu0 0.0
    %1609 = vmatprep.subr.mxu0 0.0
    %1610 = vmatpush1.msra.mxu0 0.0
    %1611 = vmatprep.subr.mxu0 0.0
    %1612 = vmatpush1.msra.mxu0 0.0
    %1613 = vmatprep.subr.mxu0 0.0
    %1614 = vmatpush1.msra.mxu0 0.0
    %1615 = vmatprep.subr.mxu0 0.0
    %1616 = vmatpush1.msra.mxu0 0.0
    %1617 = vmatprep.subr.mxu0 0.0
    %1618 = vmatpush1.msra.mxu0 0.0
    %1619 = vmatprep.subr.mxu0 0.0
    %1620 = vmatpush1.msra.mxu0 0.0
    %1621 = vmatprep.subr.mxu0 0.0
    %1622 = vmatpush1.msra.mxu0 0.0
    %1623 = vmatprep.subr.mxu0 0.0
    %1624 = vmatpush1.msra.mxu0 0.0
    %1625 = vmatprep.mubr.f32.mxu0 0.0
    %v1626 = vand.u32 %v1246, 4294901760
    %v1627 = vsub.f32 %v1246, %v1626
    %1628 = vmatmul.mubr.f32.gmra.mrb[0].mxu0 %v1627
    %v1629 = vpop.f32.mrb[0].mxu0
    %v1630 = vadd.f32 %v1520, %v1629
    %v1631 = vpop.f32.mrb[0].mxu0
    %1632 = vmatprep.mubr.f32.mxu0 0.0
    %v1633 = vand.u32 %v1247, 4294901760
    %v1634 = vsub.f32 %v1247, %v1633
    %1635 = vmatmul.mubr.f32.gmra.mrb[0].mxu0 %v1634
    %v1636 = vpop.f32.mrb[0].mxu0
    %v1637 = vadd.f32 %v1526, %v1636
    %v1638 = vpop.f32.mrb[0].mxu0
    %1639 = vdwg.mxu0
    %1640 = vmatprep.subr.mxu0 0.0
    %v1641 = vand.u32 %v1248, 4294901760
    %1642 = vmatpush1.msra.mxu0 %v1641
    %1643 = vmatprep.subr.mxu0 0.0
    %v1644 = vand.u32 %v1249, 4294901760
    %1645 = vmatpush1.msra.mxu0 %v1644
    %1646 = vmatprep.subr.mxu0 0.0
    %v1647 = vand.u32 %v1250, 4294901760
    %1648 = vmatpush1.msra.mxu0 %v1647
    %1649 = vmatprep.subr.mxu0 0.0
    %v1650 = vand.u32 %v1251, 4294901760
    %1651 = vmatpush1.msra.mxu0 %v1650
    %1652 = vmatprep.subr.mxu0 0.0
    %v1653 = vand.u32 %v1252, 4294901760
    %1654 = vmatpush1.msra.mxu0 %v1653
    %1655 = vmatprep.subr.mxu0 0.0
    %v1656 = vand.u32 %v1253, 4294901760
    %1657 = vmatpush1.msra.mxu0 %v1656
    %1658 = vmatprep.subr.mxu0 0.0
    %v1659 = vand.u32 %v1254, 4294901760
    %1660 = vmatpush1.msra.mxu0 %v1659
    %1661 = vmatprep.subr.mxu0 0.0
    %v1662 = vand.u32 %v1255, 4294901760
    %1663 = vmatpush1.msra.mxu0 %v1662
    %1664 = vmatprep.subr.mxu0 0.0
    %v1665 = vand.u32 %v1256, 4294901760
    %1666 = vmatpush1.msra.mxu0 %v1665
    %1667 = vmatprep.subr.mxu0 0.0
    %v1668 = vand.u32 %v1257, 4294901760
    %1669 = vmatpush1.msra.mxu0 %v1668
    %1670 = vmatprep.subr.mxu0 0.0
    %v1671 = vand.u32 %v1258, 4294901760
    %1672 = vmatpush1.msra.mxu0 %v1671
    %1673 = vmatprep.subr.mxu0 0.0
    %v1674 = vand.u32 %v1259, 4294901760
    %1675 = vmatpush1.msra.mxu0 %v1674
    %1676 = vmatprep.subr.mxu0 0.0
    %v1677 = vand.u32 %v1260, 4294901760
    %1678 = vmatpush1.msra.mxu0 %v1677
    %1679 = vmatprep.subr.mxu0 0.0
    %v1680 = vand.u32 %v1261, 4294901760
    %1681 = vmatpush1.msra.mxu0 %v1680
    %1682 = vmatprep.subr.mxu0 0.0
    %v1683 = vand.u32 %v1262, 4294901760
    %1684 = vmatpush1.msra.mxu0 %v1683
    %1685 = vmatprep.subr.mxu0 0.0
    %v1686 = vand.u32 %v1263, 4294901760
    %1687 = vmatpush1.msra.mxu0 %v1686
    %1688 = vmatprep.subr.mxu0 0.0
    %1689 = vmatpush1.msra.mxu0 0.0
    %1690 = vmatprep.subr.mxu0 0.0
    %1691 = vmatpush1.msra.mxu0 0.0
    %1692 = vmatprep.subr.mxu0 0.0
    %1693 = vmatpush1.msra.mxu0 0.0
    %1694 = vmatprep.subr.mxu0 0.0
    %1695 = vmatpush1.msra.mxu0 0.0
    %1696 = vmatprep.subr.mxu0 0.0
    %1697 = vmatpush1.msra.mxu0 0.0
    %1698 = vmatprep.subr.mxu0 0.0
    %1699 = vmatpush1.msra.mxu0 0.0
    %1700 = vmatprep.subr.mxu0 0.0
    %1701 = vmatpush1.msra.mxu0 0.0
    %1702 = vmatprep.subr.mxu0 0.0
    %1703 = vmatpush1.msra.mxu0 0.0
    %1704 = vmatprep.subr.mxu0 0.0
    %1705 = vmatpush1.msra.mxu0 0.0
    %1706 = vmatprep.subr.mxu0 0.0
    %1707 = vmatpush1.msra.mxu0 0.0
    %1708 = vmatprep.subr.mxu0 0.0
    %1709 = vmatpush1.msra.mxu0 0.0
    %1710 = vmatprep.subr.mxu0 0.0
    %1711 = vmatpush1.msra.mxu0 0.0
    %1712 = vmatprep.subr.mxu0 0.0
    %1713 = vmatpush1.msra.mxu0 0.0
    %1714 = vmatprep.subr.mxu0 0.0
    %1715 = vmatpush1.msra.mxu0 0.0
    %1716 = vmatprep.subr.mxu0 0.0
    %1717 = vmatpush1.msra.mxu0 0.0
    %1718 = vmatprep.subr.mxu0 0.0
    %1719 = vmatpush1.msra.mxu0 0.0
    %1720 = vmatprep.mubr.f32.mxu0 0.0
    %v1721 = vand.u32 %v1246, 4294901760
    %v1722 = vsub.f32 %v1246, %v1721
    %v1723 = vand.u32 %v1722, 4294901760
    %1724 = vmatmul.mubr.f32.gmra.mrb[0].mxu0 %v1723
    %v1725 = vpop.f32.mrb[0].mxu0
    %v1726 = vadd.f32 %v1630, %v1725
    %v1727 = vpop.f32.mrb[0].mxu0
    %1728 = vmatprep.mubr.f32.mxu0 0.0
    %v1729 = vand.u32 %v1247, 4294901760
    %v1730 = vsub.f32 %v1247, %v1729
    %v1731 = vand.u32 %v1730, 4294901760
    %1732 = vmatmul.mubr.f32.gmra.mrb[0].mxu0 %v1731
    %v1733 = vpop.f32.mrb[0].mxu0
    %v1734 = vadd.f32 %v1637, %v1733
    %v1735 = vpop.f32.mrb[0].mxu0
    %1736 = vdwg.mxu0
    %1737 = vmatprep.subr.mxu0 0.0
    %v1738 = vand.u32 %v1248, 4294901760
    %v1739 = vsub.f32 %v1248, %v1738
    %v1740 = vand.u32 %v1739, 4294901760
    %1741 = vmatpush1.msra.mxu0 %v1740
    %1742 = vmatprep.subr.mxu0 0.0
    %v1743 = vand.u32 %v1249, 4294901760
    %v1744 = vsub.f32 %v1249, %v1743
    %v1745 = vand.u32 %v1744, 4294901760
    %1746 = vmatpush1.msra.mxu0 %v1745
    %1747 = vmatprep.subr.mxu0 0.0
    %v1748 = vand.u32 %v1250, 4294901760
    %v1749 = vsub.f32 %v1250, %v1748
    %v1750 = vand.u32 %v1749, 4294901760
    %1751 = vmatpush1.msra.mxu0 %v1750
    %1752 = vmatprep.subr.mxu0 0.0
    %v1753 = vand.u32 %v1251, 4294901760
    %v1754 = vsub.f32 %v1251, %v1753
    %v1755 = vand.u32 %v1754, 4294901760
    %1756 = vmatpush1.msra.mxu0 %v1755
    %1757 = vmatprep.subr.mxu0 0.0
    %v1758 = vand.u32 %v1252, 4294901760
    %v1759 = vsub.f32 %v1252, %v1758
    %v1760 = vand.u32 %v1759, 4294901760
    %1761 = vmatpush1.msra.mxu0 %v1760
    %1762 = vmatprep.subr.mxu0 0.0
    %v1763 = vand.u32 %v1253, 4294901760
    %v1764 = vsub.f32 %v1253, %v1763
    %v1765 = vand.u32 %v1764, 4294901760
    %1766 = vmatpush1.msra.mxu0 %v1765
    %1767 = vmatprep.subr.mxu0 0.0
    %v1768 = vand.u32 %v1254, 4294901760
    %v1769 = vsub.f32 %v1254, %v1768
    %v1770 = vand.u32 %v1769, 4294901760
    %1771 = vmatpush1.msra.mxu0 %v1770
    %1772 = vmatprep.subr.mxu0 0.0
    %v1773 = vand.u32 %v1255, 4294901760
    %v1774 = vsub.f32 %v1255, %v1773
    %v1775 = vand.u32 %v1774, 4294901760
    %1776 = vmatpush1.msra.mxu0 %v1775
    %1777 = vmatprep.subr.mxu0 0.0
    %v1778 = vand.u32 %v1256, 4294901760
    %v1779 = vsub.f32 %v1256, %v1778
    %v1780 = vand.u32 %v1779, 4294901760
    %1781 = vmatpush1.msra.mxu0 %v1780
    %1782 = vmatprep.subr.mxu0 0.0
    %v1783 = vand.u32 %v1257, 4294901760
    %v1784 = vsub.f32 %v1257, %v1783
    %v1785 = vand.u32 %v1784, 4294901760
    %1786 = vmatpush1.msra.mxu0 %v1785
    %1787 = vmatprep.subr.mxu0 0.0
    %v1788 = vand.u32 %v1258, 4294901760
    %v1789 = vsub.f32 %v1258, %v1788
    %v1790 = vand.u32 %v1789, 4294901760
    %1791 = vmatpush1.msra.mxu0 %v1790
    %1792 = vmatprep.subr.mxu0 0.0
    %v1793 = vand.u32 %v1259, 4294901760
    %v1794 = vsub.f32 %v1259, %v1793
    %v1795 = vand.u32 %v1794, 4294901760
    %1796 = vmatpush1.msra.mxu0 %v1795
    %1797 = vmatprep.subr.mxu0 0.0
    %v1798 = vand.u32 %v1260, 4294901760
    %v1799 = vsub.f32 %v1260, %v1798
    %v1800 = vand.u32 %v1799, 4294901760
    %1801 = vmatpush1.msra.mxu0 %v1800
    %1802 = vmatprep.subr.mxu0 0.0
    %v1803 = vand.u32 %v1261, 4294901760
    %v1804 = vsub.f32 %v1261, %v1803
    %v1805 = vand.u32 %v1804, 4294901760
    %1806 = vmatpush1.msra.mxu0 %v1805
    %1807 = vmatprep.subr.mxu0 0.0
    %v1808 = vand.u32 %v1262, 4294901760
    %v1809 = vsub.f32 %v1262, %v1808
    %v1810 = vand.u32 %v1809, 4294901760
    %1811 = vmatpush1.msra.mxu0 %v1810
    %1812 = vmatprep.subr.mxu0 0.0
    %v1813 = vand.u32 %v1263, 4294901760
    %v1814 = vsub.f32 %v1263, %v1813
    %v1815 = vand.u32 %v1814, 4294901760
    %1816 = vmatpush1.msra.mxu0 %v1815
    %1817 = vmatprep.subr.mxu0 0.0
    %1818 = vmatpush1.msra.mxu0 0.0
    %1819 = vmatprep.subr.mxu0 0.0
    %1820 = vmatpush1.msra.mxu0 0.0
    %1821 = vmatprep.subr.mxu0 0.0
    %1822 = vmatpush1.msra.mxu0 0.0
    %1823 = vmatprep.subr.mxu0 0.0
    %1824 = vmatpush1.msra.mxu0 0.0
    %1825 = vmatprep.subr.mxu0 0.0
    %1826 = vmatpush1.msra.mxu0 0.0
    %1827 = vmatprep.subr.mxu0 0.0
    %1828 = vmatpush1.msra.mxu0 0.0
    %1829 = vmatprep.subr.mxu0 0.0
    %1830 = vmatpush1.msra.mxu0 0.0
    %1831 = vmatprep.subr.mxu0 0.0
    %1832 = vmatpush1.msra.mxu0 0.0
    %1833 = vmatprep.subr.mxu0 0.0
    %1834 = vmatpush1.msra.mxu0 0.0
    %1835 = vmatprep.subr.mxu0 0.0
    %1836 = vmatpush1.msra.mxu0 0.0
    %1837 = vmatprep.subr.mxu0 0.0
    %1838 = vmatpush1.msra.mxu0 0.0
    %1839 = vmatprep.subr.mxu0 0.0
    %1840 = vmatpush1.msra.mxu0 0.0
    %1841 = vmatprep.subr.mxu0 0.0
    %1842 = vmatpush1.msra.mxu0 0.0
    %1843 = vmatprep.subr.mxu0 0.0
    %1844 = vmatpush1.msra.mxu0 0.0
    %1845 = vmatprep.subr.mxu0 0.0
    %1846 = vmatpush1.msra.mxu0 0.0
    %1847 = vmatprep.subr.mxu0 0.0
    %1848 = vmatpush1.msra.mxu0 0.0
    %1849 = vmatprep.mubr.f32.mxu0 0.0
    %v1850 = vand.u32 %v1246, 4294901760
    %1851 = vmatmul.mubr.f32.gmra.mrb[0].mxu0 %v1850
    %v1852 = vpop.f32.mrb[0].mxu0
    %v1853 = vadd.f32 %v1726, %v1852
    %v1854 = vpop.f32.mrb[0].mxu0
    %1855 = vmatprep.mubr.f32.mxu0 0.0
    %v1856 = vand.u32 %v1247, 4294901760
    %1857 = vmatmul.mubr.f32.gmra.mrb[0].mxu0 %v1856
    %v1858 = vpop.f32.mrb[0].mxu0
    %v1859 = vadd.f32 %v1734, %v1858
    %v1860 = vpop.f32.mrb[0].mxu0
    %1861 = vdwg.mxu0
    %1862 = vmatprep.subr.mxu0 0.0
    %v1863 = vand.u32 %v1248, 4294901760
    %1864 = vmatpush1.msra.mxu0 %v1863
    %1865 = vmatprep.subr.mxu0 0.0
    %v1866 = vand.u32 %v1249, 4294901760
    %1867 = vmatpush1.msra.mxu0 %v1866
    %1868 = vmatprep.subr.mxu0 0.0
    %v1869 = vand.u32 %v1250, 4294901760
    %1870 = vmatpush1.msra.mxu0 %v1869
    %1871 = vmatprep.subr.mxu0 0.0
    %v1872 = vand.u32 %v1251, 4294901760
    %1873 = vmatpush1.msra.mxu0 %v1872
    %1874 = vmatprep.subr.mxu0 0.0
    %v1875 = vand.u32 %v1252, 4294901760
    %1876 = vmatpush1.msra.mxu0 %v1875
    %1877 = vmatprep.subr.mxu0 0.0
    %v1878 = vand.u32 %v1253, 4294901760
    %1879 = vmatpush1.msra.mxu0 %v1878
    %1880 = vmatprep.subr.mxu0 0.0
    %v1881 = vand.u32 %v1254, 4294901760
    %1882 = vmatpush1.msra.mxu0 %v1881
    %1883 = vmatprep.subr.mxu0 0.0
    %v1884 = vand.u32 %v1255, 4294901760
    %1885 = vmatpush1.msra.mxu0 %v1884
    %1886 = vmatprep.subr.mxu0 0.0
    %v1887 = vand.u32 %v1256, 4294901760
    %1888 = vmatpush1.msra.mxu0 %v1887
    %1889 = vmatprep.subr.mxu0 0.0
    %v1890 = vand.u32 %v1257, 4294901760
    %1891 = vmatpush1.msra.mxu0 %v1890
    %1892 = vmatprep.subr.mxu0 0.0
    %v1893 = vand.u32 %v1258, 4294901760
    %1894 = vmatpush1.msra.mxu0 %v1893
    %1895 = vmatprep.subr.mxu0 0.0
    %v1896 = vand.u32 %v1259, 4294901760
    %1897 = vmatpush1.msra.mxu0 %v1896
    %1898 = vmatprep.subr.mxu0 0.0
    %v1899 = vand.u32 %v1260, 4294901760
    %1900 = vmatpush1.msra.mxu0 %v1899
    %1901 = vmatprep.subr.mxu0 0.0
    %v1902 = vand.u32 %v1261, 4294901760
    %1903 = vmatpush1.msra.mxu0 %v1902
    %1904 = vmatprep.subr.mxu0 0.0
    %v1905 = vand.u32 %v1262, 4294901760
    %1906 = vmatpush1.msra.mxu0 %v1905
    %1907 = vmatprep.subr.mxu0 0.0
    %v1908 = vand.u32 %v1263, 4294901760
    %1909 = vmatpush1.msra.mxu0 %v1908
    %1910 = vmatprep.subr.mxu0 0.0
    %1911 = vmatpush1.msra.mxu0 0.0
    %1912 = vmatprep.subr.mxu0 0.0
    %1913 = vmatpush1.msra.mxu0 0.0
    %1914 = vmatprep.subr.mxu0 0.0
    %1915 = vmatpush1.msra.mxu0 0.0
    %1916 = vmatprep.subr.mxu0 0.0
    %1917 = vmatpush1.msra.mxu0 0.0
    %1918 = vmatprep.subr.mxu0 0.0
    %1919 = vmatpush1.msra.mxu0 0.0
    %1920 = vmatprep.subr.mxu0 0.0
    %1921 = vmatpush1.msra.mxu0 0.0
    %1922 = vmatprep.subr.mxu0 0.0
    %1923 = vmatpush1.msra.mxu0 0.0
    %1924 = vmatprep.subr.mxu0 0.0
    %1925 = vmatpush1.msra.mxu0 0.0
    %1926 = vmatprep.subr.mxu0 0.0
    %1927 = vmatpush1.msra.mxu0 0.0
    %1928 = vmatprep.subr.mxu0 0.0
    %1929 = vmatpush1.msra.mxu0 0.0
    %1930 = vmatprep.subr.mxu0 0.0
    %1931 = vmatpush1.msra.mxu0 0.0
    %1932 = vmatprep.subr.mxu0 0.0
    %1933 = vmatpush1.msra.mxu0 0.0
    %1934 = vmatprep.subr.mxu0 0.0
    %1935 = vmatpush1.msra.mxu0 0.0
    %1936 = vmatprep.subr.mxu0 0.0
    %1937 = vmatpush1.msra.mxu0 0.0
    %1938 = vmatprep.subr.mxu0 0.0
    %1939 = vmatpush1.msra.mxu0 0.0
    %1940 = vmatprep.subr.mxu0 0.0
    %1941 = vmatpush1.msra.mxu0 0.0
    %1942 = vmatprep.mubr.f32.mxu0 0.0
    %v1943 = vand.u32 %v1246, 4294901760
    %1944 = vmatmul.mubr.f32.gmra.mrb[0].mxu0 %v1943
    %v1945 = vpop.f32.mrb[0].mxu0
    %v1946 = vadd.f32 %v1853, %v1945
    %v1947 = vpop.f32.mrb[0].mxu0
    %1948 = vmatprep.mubr.f32.mxu0 0.0
    %v1949 = vand.u32 %v1247, 4294901760
    %1950 = vmatmul.mubr.f32.gmra.mrb[0].mxu0 %v1949
    %v1951 = vpop.f32.mrb[0].mxu0
    %v1952 = vadd.f32 %v1859, %v1951
    %v1953 = vpop.f32.mrb[0].mxu0
    %1954 = vdwg.mxu0
    %vm1955 = vcmask 261120
    %1956 = vst.msk [vmem:[#allocation2] sm:$0xff] %vm1955, %v1946
    %1957 = vst.msk [vmem:[#allocation2 + $0x8] sm:$0xff] %vm1955, %v1952
    // Predicated region
    $region30: #{tpu_custom_call.1} parent=1 // pred_check
      _
    $region31: #{tpu_custom_call.1} parent=1 // pred_check_branch
      %1959 = sbr.rel (0) target = $region33
    $region32: #{tpu_custom_call.1} parent=1 // pred_region
      %s1961 = ssub.s32 256, 256
      %1962 = vsyncadd [#allocation3], %s1961
      %s1963 = sshll.u32 [#allocation2], 4
      %s1964 = int_to_ptr.vmem [resolvable:$true] %s1963
      %1969 = dma.vmem_to_hbm [thread:$0]  %s1964, 256, %s7, [#allocation3], 128, 128, 8
    $region33: #{tpu_custom_call.1} parent=1 // pred_fallthru
      _
    // Predicated region
    $region34: #{tpu_custom_call.1} parent=1 // pred_check
      _
    $region35: #{tpu_custom_call.1} parent=1 // pred_check_branch
      %1971 = sbr.rel (0) target = $region37
    $region36: #{tpu_custom_call.1} parent=1 // pred_region
      %1972 = dma.done [#allocation3], 256
    $region37: #{tpu_custom_call.1} parent=1 // pred_fallthru
      _
    %1973 = vsyncpa [#allocation3], 1

</llo_original>
